<compile_context>
chip_gen: v5e
topology: v5e:2x2
jax: 0.10.0
libtpu: 0.0.40
codegen_flags: <defaults>
</compile_context>

<pallas_src>
import math

import jax
import jax.numpy as jnp
from jax import lax
from jax.experimental import pallas as pl
from jax.experimental.pallas import tpu as pltpu

# ---------------- model constants (match the PyTorch module) ----------------
V_NA, V_K, V_L = 115.0, -12.0, 10.6
GBAR_NA, GBAR_K, GBAR_L = 120.0, 36.0, 0.3
DT = 0.1
THRESH = 2.3


# ------------------------------- Pallas kernel -------------------------------
def hh_kernel(patches_ref, w_ref, bias_ref, coef_ref, out_ref, conv_sc):
    # patches_ref: [1, CKKp, T*RB]   w_ref: [Cout, CKKp]   bias_ref: [Cout, 1]
    # coef_ref:    [8, RB]           out_ref: [T, Bc, Cout, HW] (bf16 spikes)
    # conv_sc:     [Cout, T*RB] f32 VMEM scratch
    Cout = w_ref.shape[0]
    T, Bc, _, HW = out_ref.shape
    RB = Bc * HW

    # One MXU matmul for ALL T time steps: weights pushed once, [Cout, T*RB] result
    # parked in VMEM, off the VPU critical path.
    conv_sc[...] = jnp.dot(w_ref[...], patches_ref[0],
                           preferred_element_type=jnp.float32)

    # Hoisted broadcasts (JAX does not CSE broadcast_in_dim inside the unrolled loop).
    coef = coef_ref[...]
    decay_n = jnp.broadcast_to(coef[0:1], (Cout, RB))
    drive_n = jnp.broadcast_to(coef[1:2], (Cout, RB))
    decay_m = jnp.broadcast_to(coef[2:3], (Cout, RB))
    drive_m = jnp.broadcast_to(coef[3:4], (Cout, RB))
    decay_h = jnp.broadcast_to(coef[4:5], (Cout, RB))
    drive_h = jnp.broadcast_to(coef[5:6], (Cout, RB))
    bias_b = jnp.broadcast_to(bias_ref[...], (Cout, RB))

    zeros = jnp.zeros((Cout, RB), jnp.float32)

    def step(t, state):
        v, y, m, h = state
        off = pl.multiple_of(t * RB, 128)
        conv = conv_sc[:, pl.ds(off, RB)] + bias_b
        m3 = m * m * m
        y2 = y * y
        i_na = (GBAR_NA * (h * m3)) * (v - V_NA)
        i_k = (GBAR_K * (y2 * y2)) * (v - V_K)
        i_l = GBAR_L * (v - V_L)
        new_v = v + (conv - i_na - i_k - i_l) * DT
        # gate updates folded:  g + (a(1-g) - b g) dt  ==  g * (1-(a+b)dt) + a dt
        new_n = y * decay_n + drive_n
        new_m = m * decay_m + drive_m
        new_h = h * decay_h + drive_h
        spike = (new_v - THRESH > 0.0).astype(jnp.float32).astype(out_ref.dtype)
        for bc in range(Bc):  # lane-dense [Cout, HW] stores (HW multiple of 128)
            out_ref[t, bc] = spike[:, bc * HW:(bc + 1) * HW]
        return new_v, new_n, new_m, new_h

    lax.fori_loop(0, T, step, (zeros, zeros, zeros, zeros), unroll=True)


# --------------------------------- glue (JAX) ---------------------------------
def _tensorcores_per_chip() -> int:
    """2 on v7x-class (and v4/v5p megacore) parts, 1 on v5e/v6e. Perf-only heuristic."""
    try:
        kind = jax.devices()[0].device_kind.lower()
    except Exception:
        return 1
    return 2 if any(tag in kind for tag in ("v7", "v4", "v5p")) else 1


def hh_neuron_forward_pallas(x, weight, bias, coes_1d, *, stride=1, padding=1):
    """x: [B, T, Cin, H, W]; weight: [Cout, Cin, K, K]; bias: [Cout]; coes_1d: 6 x [W]."""
    B, T, Cin, H, W = x.shape
    Cout, _, K, _ = weight.shape
    HW = H * W
    Hp, Wp = H // 2, W // 2
    CKK = Cin * K * K
    CKKp = ((CKK + 7) // 8) * 8          # 27 -> 32: clean (8,128)-aligned MXU tiles
    # TODO(synk): pad H*W up to a multiple of 128 for other feature-map sizes.
    assert HW % 128 == 0, "H*W must be a multiple of 128 for unmasked lane-dense stores"

    # ---- grid: batch-chunk blocks; 1 on single-TC chips, 2 on 2-TC chips, grown ----
    # ---- further only if a block would exceed the (v7x-safe) VMEM budget.        ----
    n_tc = _tensorcores_per_chip()
    n_blocks = n_tc if (B % n_tc == 0) else 1

    def block_bytes(nb):
        bc = B // nb
        rb = bc * HW
        return (2 * CKKp * T * rb * 4          # double-buffered patches block
                + 2 * T * bc * Cout * HW * 2   # double-buffered bf16 spike block
                + Cout * T * rb * 4            # conv VMEM scratch
                + 8 * rb * 4)                  # coef slab

    VMEM_BUDGET = 24 * 1024 * 1024
    while block_bytes(n_blocks) > VMEM_BUDGET and B % (2 * n_blocks) == 0:
        n_blocks *= 2
    Bc = B // n_blocks
    RB = Bc * HW

    # ---- im2col: one fused op over all B*T frames -> [n_blocks, CKKp, T*RB] ----
    x_bt = x.reshape(B * T, Cin, H, W).astype(jnp.float32)
    patches = lax.conv_general_dilated_patches(
        x_bt, (K, K), (stride, stride),
        ((padding, padding), (padding, padding)),
        dimension_numbers=("NCHW", "OIHW", "NCHW"))              # [B*T, CKK, H, W]
    patches = patches.reshape(n_blocks, Bc, T, CKK, HW)
    patches = patches.transpose(0, 3, 2, 1, 4).reshape(n_blocks, CKK, T * RB)
    patches = jnp.pad(patches, ((0, 0), (0, CKKp - CKK), (0, 0)))

    w2 = jnp.pad(weight.reshape(Cout, CKK).astype(jnp.float32),
                 ((0, 0), (0, CKKp - CKK)))
    bias2 = bias.reshape(Cout, 1).astype(jnp.float32)

    # Gate coefficients folded into decay/drive form (one FMA per gate per element);
    # the coefficient is indexed by conv-output width -> tile over (batch-in-block, h).
    # NOTE: the PyTorch module assigns b_h = a_h_coe, a_h = b_h_coe (swapped); this is
    # the single place where that swap is reproduced.
    a_n, b_n, a_m, b_m, a_h_coe, b_h_coe = coes_1d
    b_h, a_h = a_h_coe, b_h_coe

    def lane_row(c):
        return jnp.tile(c, Bc * H)

    coef = jnp.stack([
        lane_row(1.0 - (a_n + b_n) * DT), lane_row(a_n * DT),
        lane_row(1.0 - (a_m + b_m) * DT), lane_row(a_m * DT),
        lane_row(1.0 - (a_h + b_h) * DT), lane_row(a_h * DT),
        jnp.zeros((RB,), jnp.float32), jnp.zeros((RB,), jnp.float32),  # pad to 8 rows
    ], axis=0).astype(jnp.float32)                                     # [8, RB]

    spikes = pl.pallas_call(
        hh_kernel,
        out_shape=jax.ShapeDtypeStruct((T, B, Cout, HW), jnp.bfloat16),
        grid_spec=pltpu.PrefetchScalarGridSpec(
            num_scalar_prefetch=0,
            grid=(n_blocks,),
            in_specs=[
                pl.BlockSpec((1, CKKp, T * RB), lambda r: (r, 0, 0)),
                pl.BlockSpec((Cout, CKKp), lambda r: (0, 0)),
                pl.BlockSpec((Cout, 1), lambda r: (0, 0)),
                pl.BlockSpec((8, RB), lambda r: (0, 0)),
            ],
            out_specs=pl.BlockSpec((T, Bc, Cout, HW), lambda r: (0, r, 0, 0)),
            scratch_shapes=[pltpu.VMEM((Cout, T * RB), jnp.float32)],
        ),
        compiler_params=pltpu.CompilerParams(
            dimension_semantics=("parallel",),
            vmem_limit_bytes=32 * 1024 * 1024,
        ),
    )(patches, w2, bias2, coef)

    # [T, B, Cout, HW] bf16 (exact 0/1) -> fused 2x2 avg-pool (no full-size transpose)
    pooled = spikes.reshape(T, B, Cout, Hp, 2, Wp, 2).astype(jnp.float32).mean(axis=(4, 6))
    return pooled.transpose(1, 0, 2, 3, 4)       # [B, T, Cout, Hp, Wp]


# ----------------------------- pure-JAX reference -----------------------------
def hh_neuron_forward_ref(x, weight, bias, coes_1d, *, stride=1, padding=1):
    B, T, Cin, H, W = x.shape
    Cout = weight.shape[0]
    a_n, b_n, a_m, b_m, a_h_coe, b_h_coe = coes_1d
    b_h, a_h = a_h_coe, b_h_coe  # same swap as the module
    v = jnp.zeros((B, Cout, H, W), jnp.float32)
    y = jnp.zeros_like(v)
    m = jnp.zeros_like(v)
    h = jnp.zeros_like(v)
    outs = []
    for t in range(T):
        conv = lax.conv_general_dilated(
            x[:, t], weight, (stride, stride), ((padding, padding), (padding, padding)),
            dimension_numbers=("NCHW", "OIHW", "NCHW"),
            precision=lax.Precision.HIGHEST) + bias[None, :, None, None]
        g_na = GBAR_NA * h * m ** 3
        g_k = GBAR_K * y ** 4
        i_na = g_na * (v - V_NA)
        i_k = g_k * (v - V_K)
        i_l = GBAR_L * (v - V_L)
        new_v = v + (conv - i_na - i_k - i_l) * DT
        new_n = y + (a_n * (1 - y) - b_n * y) * DT
        new_m = m + (a_m * (1 - m) - b_m * m) * DT
        new_h = h + (a_h * (1 - h) - b_h * h) * DT
        spike = (new_v - THRESH > 0).astype(jnp.float32)
        v, y, m, h = new_v, new_n, new_m, new_h
        outs.append(spike.reshape(B, Cout, H // 2, 2, W // 2, 2).mean(axis=(3, 5)))
    return jnp.stack(outs, axis=1)


# ------------------------------------ main ------------------------------------
if __name__ == "__main__":
    B, T = 2, 8                  # batch, time window
    Cin, Cout = 3, 8             # in_planes, out_planes
    K, stride, padding = 3, 1, 1
    fms = 16                     # feature_map_size (conv output spatial size)

    key = jax.random.PRNGKey(0)
    kw, kb, k1, k2, k3, k4, k5, k6, kx = jax.random.split(key, 9)

    fan_in = Cin * K * K
    bound = 1.0 / math.sqrt(fan_in)
    # Conv2d default init, then *5 like the module does
    weight = jax.random.uniform(kw, (Cout, Cin, K, K), jnp.float32, -bound, bound) * 5.0
    bias = jax.random.uniform(kb, (Cout,), jnp.float32, -bound, bound)
    # a_n, b_n, a_m, b_m, a_h_coe, b_h_coe = 0.1 * rand(fms)
    coes_1d = [0.1 * jax.random.uniform(k, (fms,), jnp.float32) for k in (k1, k2, k3, k4, k5, k6)]

    x = jax.random.normal(kx, (B, T, Cin, fms, fms), jnp.float32)

    out = hh_neuron_forward_pallas(x, weight, bias, coes_1d, stride=stride, padding=padding)
    out = jax.block_until_ready(out)

    assert out.shape == (B, T, Cout, fms // 2, fms // 2), out.shape
    assert bool(jnp.all(jnp.isfinite(out)))

    # sanity check vs. pure-JAX reference (hard spike threshold can flip on rare
    # near-threshold ties between conv precisions/algorithms -> small tolerance)
    ref = hh_neuron_forward_ref(x, weight, bias, coes_1d, stride=stride, padding=padding)
    mismatch_frac = float(jnp.mean((jnp.abs(out - ref) > 0.1).astype(jnp.float32)))
    assert mismatch_frac < 0.01, f"mismatch fraction {mismatch_frac}"

    print("KERNEL_OK")
</pallas_src>

<mosaic_0001>
module attributes {stable_mosaic.version = 11 : i64} {
  func.func @hh_kernel(%arg0: i32, %arg1: memref<1x32x4096xf32, #tpu.memory_space<vmem>>, %arg2: memref<8x32xf32, #tpu.memory_space<vmem>>, %arg3: memref<8x1xf32, #tpu.memory_space<vmem>>, %arg4: memref<8x512xf32, #tpu.memory_space<vmem>>, %arg5: memref<8x2x8x256xbf16, #tpu.memory_space<vmem>>, %arg6: memref<8x4096xf32, #tpu.memory_space<vmem>>) attributes {dimension_semantics = [#tpu.dimension_semantics<parallel>], iteration_bounds = array<i64: 1>, scalar_prefetch = 0 : i64, scratch_operands = 1 : i64, tpu.core_type = #tpu.core_type<tc>, window_params = [{transform_indices = @transform_0, window_bounds = array<i64: 1, 32, 4096>}, {pipeline_mode = #tpu.pipeline_mode<synchronous>, transform_indices = @transform_1, window_bounds = array<i64: 8, 32>}, {pipeline_mode = #tpu.pipeline_mode<synchronous>, transform_indices = @transform_2, window_bounds = array<i64: 8, 1>}, {pipeline_mode = #tpu.pipeline_mode<synchronous>, transform_indices = @transform_3, window_bounds = array<i64: 8, 512>}, {transform_indices = @transform_4, window_bounds = array<i64: 8, 2, 8, 256>}]} {
    %c0 = arith.constant 0 : index
    %c0_0 = arith.constant 0 : index
    %0 = vector.load %arg2[%c0, %c0_0] : memref<8x32xf32, #tpu.memory_space<vmem>>, vector<8x32xf32>
    %c0_1 = arith.constant 0 : index
    %c0_2 = arith.constant 0 : index
    %c0_3 = arith.constant 0 : index
    %1 = vector.load %arg1[%c0_1, %c0_2, %c0_3] : memref<1x32x4096xf32, #tpu.memory_space<vmem>>, vector<1x32x4096xf32>
    %2 = vector.shape_cast %1 : vector<1x32x4096xf32> to vector<32x4096xf32>
    %cst = arith.constant dense<0.000000e+00> : vector<8x4096xf32>
    %3 = tpu.matmul %0, %2, %cst {dimension_numbers = #tpu.dot_dimension_numbers<[1], [0], [0], [1], [0, 0, 1, 1], [], []>} : vector<8x32xf32>, vector<32x4096xf32>, vector<8x4096xf32> -> vector<8x4096xf32>
    %c0_4 = arith.constant 0 : index
    %c0_5 = arith.constant 0 : index
    %4 = vector.load %arg6[%c0_4, %c0_5] : memref<8x4096xf32, #tpu.memory_space<vmem>>, vector<8x4096xf32>
    tpu.vector_store %arg6[%c0_4, %c0_5], %3 {strides = array<i32>} : memref<8x4096xf32, #tpu.memory_space<vmem>>, vector<8x4096xf32>,
    %c0_6 = arith.constant 0 : index
    %c0_7 = arith.constant 0 : index
    %5 = vector.load %arg4[%c0_6, %c0_7] : memref<8x512xf32, #tpu.memory_space<vmem>>, vector<8x512xf32>
    %6 = vector.extract_strided_slice %5 {offsets = [0, 0], sizes = [1, 512], strides = [1, 1]} : vector<8x512xf32> to vector<1x512xf32>
    %7 = vector.shape_cast %6 : vector<1x512xf32> to vector<1x512xf32>
    %8 = vector.broadcast %7 : vector<1x512xf32> to vector<8x512xf32>
    %9 = vector.extract_strided_slice %5 {offsets = [1, 0], sizes = [1, 512], strides = [1, 1]} : vector<8x512xf32> to vector<1x512xf32>
    %10 = vector.shape_cast %9 : vector<1x512xf32> to vector<1x512xf32>
    %11 = vector.broadcast %10 : vector<1x512xf32> to vector<8x512xf32>
    %12 = vector.extract_strided_slice %5 {offsets = [2, 0], sizes = [1, 512], strides = [1, 1]} : vector<8x512xf32> to vector<1x512xf32>
    %13 = vector.shape_cast %12 : vector<1x512xf32> to vector<1x512xf32>
    %14 = vector.broadcast %13 : vector<1x512xf32> to vector<8x512xf32>
    %15 = vector.extract_strided_slice %5 {offsets = [3, 0], sizes = [1, 512], strides = [1, 1]} : vector<8x512xf32> to vector<1x512xf32>
    %16 = vector.shape_cast %15 : vector<1x512xf32> to vector<1x512xf32>
    %17 = vector.broadcast %16 : vector<1x512xf32> to vector<8x512xf32>
    %18 = vector.extract_strided_slice %5 {offsets = [4, 0], sizes = [1, 512], strides = [1, 1]} : vector<8x512xf32> to vector<1x512xf32>
    %19 = vector.shape_cast %18 : vector<1x512xf32> to vector<1x512xf32>
    %20 = vector.broadcast %19 : vector<1x512xf32> to vector<8x512xf32>
    %21 = vector.extract_strided_slice %5 {offsets = [5, 0], sizes = [1, 512], strides = [1, 1]} : vector<8x512xf32> to vector<1x512xf32>
    %22 = vector.shape_cast %21 : vector<1x512xf32> to vector<1x512xf32>
    %23 = vector.broadcast %22 : vector<1x512xf32> to vector<8x512xf32>
    %c0_8 = arith.constant 0 : index
    %c0_9 = arith.constant 0 : index
    %24 = vector.load %arg3[%c0_8, %c0_9] : memref<8x1xf32, #tpu.memory_space<vmem>>, vector<8x1xf32>
    %25 = vector.shape_cast %24 : vector<8x1xf32> to vector<8x1xf32>
    %26 = vector.broadcast %25 : vector<8x1xf32> to vector<8x512xf32>
    %cst_10 = arith.constant 0.000000e+00 : f32
    %27 = vector.broadcast %cst_10 : f32 to vector<8x512xf32>
    %c0_i32 = arith.constant 0 : i32
    %c512_i32 = arith.constant 512 : i32
    %28 = arith.muli %c0_i32, %c512_i32 : i32
    %29 = tpu.assume_multiple %28, 128 : i32
    %c0_11 = arith.constant 0 : index
    %30 = arith.index_cast %29 : i32 to index
    %31 = vector.load %arg6[%c0_11, %30] : memref<8x4096xf32, #tpu.memory_space<vmem>>, vector<8x512xf32>
    %32 = arith.addf %31, %26 : vector<8x512xf32>
    %33 = arith.mulf %27, %27 : vector<8x512xf32>
    %34 = arith.mulf %33, %27 : vector<8x512xf32>
    %35 = arith.mulf %27, %27 : vector<8x512xf32>
    %36 = arith.mulf %27, %34 : vector<8x512xf32>
    %cst_12 = arith.constant 1.200000e+02 : f32
    %37 = vector.broadcast %cst_12 : f32 to vector<8x512xf32>
    %38 = arith.mulf %37, %36 : vector<8x512xf32>
    %cst_13 = arith.constant 1.150000e+02 : f32
    %39 = vector.broadcast %cst_13 : f32 to vector<8x512xf32>
    %40 = arith.subf %27, %39 : vector<8x512xf32>
    %41 = arith.mulf %38, %40 : vector<8x512xf32>
    %42 = arith.mulf %35, %35 : vector<8x512xf32>
    %cst_14 = arith.constant 3.600000e+01 : f32
    %43 = vector.broadcast %cst_14 : f32 to vector<8x512xf32>
    %44 = arith.mulf %43, %42 : vector<8x512xf32>
    %cst_15 = arith.constant -1.200000e+01 : f32
    %45 = vector.broadcast %cst_15 : f32 to vector<8x512xf32>
    %46 = arith.subf %27, %45 : vector<8x512xf32>
    %47 = arith.mulf %44, %46 : vector<8x512xf32>
    %cst_16 = arith.constant 1.060000e+01 : f32
    %48 = vector.broadcast %cst_16 : f32 to vector<8x512xf32>
    %49 = arith.subf %27, %48 : vector<8x512xf32>
    %cst_17 = arith.constant 3.000000e-01 : f32
    %50 = vector.broadcast %cst_17 : f32 to vector<8x512xf32>
    %51 = arith.mulf %50, %49 : vector<8x512xf32>
    %52 = arith.subf %32, %41 : vector<8x512xf32>
    %53 = arith.subf %52, %47 : vector<8x512xf32>
    %54 = arith.subf %53, %51 : vector<8x512xf32>
    %cst_18 = arith.constant 1.000000e-01 : f32
    %55 = vector.broadcast %cst_18 : f32 to vector<8x512xf32>
    %56 = arith.mulf %54, %55 : vector<8x512xf32>
    %57 = arith.addf %27, %56 : vector<8x512xf32>
    %58 = arith.mulf %27, %8 : vector<8x512xf32>
    %59 = arith.addf %58, %11 : vector<8x512xf32>
    %60 = arith.mulf %27, %14 : vector<8x512xf32>
    %61 = arith.addf %60, %17 : vector<8x512xf32>
    %62 = arith.mulf %27, %20 : vector<8x512xf32>
    %63 = arith.addf %62, %23 : vector<8x512xf32>
    %cst_19 = arith.constant 2.300000e+00 : f32
    %64 = vector.broadcast %cst_19 : f32 to vector<8x512xf32>
    %65 = arith.subf %57, %64 : vector<8x512xf32>
    %cst_20 = arith.constant 0.000000e+00 : f32
    %66 = vector.broadcast %cst_20 : f32 to vector<8x512xf32>
    %67 = arith.cmpf ogt, %65, %66 : vector<8x512xf32>
    %68 = arith.extui %67 : vector<8x512xi1> to vector<8x512xi32>
    %69 = arith.sitofp %68 : vector<8x512xi32> to vector<8x512xf32>
    %70 = arith.truncf %69 : vector<8x512xf32> to vector<8x512xbf16>
    %71 = vector.extract_strided_slice %70 {offsets = [0, 0], sizes = [8, 256], strides = [1, 1]} : vector<8x512xbf16> to vector<8x256xbf16>
    %72 = arith.index_cast %c0_i32 : i32 to index
    %c0_21 = arith.constant 0 : index
    %c0_22 = arith.constant 0 : index
    %c0_23 = arith.constant 0 : index
    %73 = vector.load %arg5[%72, %c0_21, %c0_22, %c0_23] : memref<8x2x8x256xbf16, #tpu.memory_space<vmem>>, vector<1x1x8x256xbf16>
    %74 = vector.shape_cast %73 : vector<1x1x8x256xbf16> to vector<8x256xbf16>
    %75 = vector.shape_cast %71 : vector<8x256xbf16> to vector<1x1x8x256xbf16>
    tpu.vector_store %arg5[%72, %c0_21, %c0_22, %c0_23], %75 {strides = array<i32>} : memref<8x2x8x256xbf16, #tpu.memory_space<vmem>>, vector<1x1x8x256xbf16>,
    %76 = vector.extract_strided_slice %70 {offsets = [0, 256], sizes = [8, 256], strides = [1, 1]} : vector<8x512xbf16> to vector<8x256xbf16>
    %77 = arith.index_cast %c0_i32 : i32 to index
    %c1 = arith.constant 1 : index
    %c0_24 = arith.constant 0 : index
    %c0_25 = arith.constant 0 : index
    %78 = vector.load %arg5[%77, %c1, %c0_24, %c0_25] : memref<8x2x8x256xbf16, #tpu.memory_space<vmem>>, vector<1x1x8x256xbf16>
    %79 = vector.shape_cast %78 : vector<1x1x8x256xbf16> to vector<8x256xbf16>
    %80 = vector.shape_cast %76 : vector<8x256xbf16> to vector<1x1x8x256xbf16>
    tpu.vector_store %arg5[%77, %c1, %c0_24, %c0_25], %80 {strides = array<i32>} : memref<8x2x8x256xbf16, #tpu.memory_space<vmem>>, vector<1x1x8x256xbf16>,
    %c1_i32 = arith.constant 1 : i32
    %c512_i32_26 = arith.constant 512 : i32
    %81 = arith.muli %c1_i32, %c512_i32_26 : i32
    %82 = tpu.assume_multiple %81, 128 : i32
    %c0_27 = arith.constant 0 : index
    %83 = arith.index_cast %82 : i32 to index
    %84 = vector.load %arg6[%c0_27, %83] : memref<8x4096xf32, #tpu.memory_space<vmem>>, vector<8x512xf32>
    %85 = arith.addf %84, %26 : vector<8x512xf32>
    %86 = arith.mulf %61, %61 : vector<8x512xf32>
    %87 = arith.mulf %86, %61 : vector<8x512xf32>
    %88 = arith.mulf %59, %59 : vector<8x512xf32>
    %89 = arith.mulf %63, %87 : vector<8x512xf32>
    %cst_28 = arith.constant 1.200000e+02 : f32
    %90 = vector.broadcast %cst_28 : f32 to vector<8x512xf32>
    %91 = arith.mulf %90, %89 : vector<8x512xf32>
    %cst_29 = arith.constant 1.150000e+02 : f32
    %92 = vector.broadcast %cst_29 : f32 to vector<8x512xf32>
    %93 = arith.subf %57, %92 : vector<8x512xf32>
    %94 = arith.mulf %91, %93 : vector<8x512xf32>
    %95 = arith.mulf %88, %88 : vector<8x512xf32>
    %cst_30 = arith.constant 3.600000e+01 : f32
    %96 = vector.broadcast %cst_30 : f32 to vector<8x512xf32>
    %97 = arith.mulf %96, %95 : vector<8x512xf32>
    %cst_31 = arith.constant -1.200000e+01 : f32
    %98 = vector.broadcast %cst_31 : f32 to vector<8x512xf32>
    %99 = arith.subf %57, %98 : vector<8x512xf32>
    %100 = arith.mulf %97, %99 : vector<8x512xf32>
    %cst_32 = arith.constant 1.060000e+01 : f32
    %101 = vector.broadcast %cst_32 : f32 to vector<8x512xf32>
    %102 = arith.subf %57, %101 : vector<8x512xf32>
    %cst_33 = arith.constant 3.000000e-01 : f32
    %103 = vector.broadcast %cst_33 : f32 to vector<8x512xf32>
    %104 = arith.mulf %103, %102 : vector<8x512xf32>
    %105 = arith.subf %85, %94 : vector<8x512xf32>
    %106 = arith.subf %105, %100 : vector<8x512xf32>
    %107 = arith.subf %106, %104 : vector<8x512xf32>
    %cst_34 = arith.constant 1.000000e-01 : f32
    %108 = vector.broadcast %cst_34 : f32 to vector<8x512xf32>
    %109 = arith.mulf %107, %108 : vector<8x512xf32>
    %110 = arith.addf %57, %109 : vector<8x512xf32>
    %111 = arith.mulf %59, %8 : vector<8x512xf32>
    %112 = arith.addf %111, %11 : vector<8x512xf32>
    %113 = arith.mulf %61, %14 : vector<8x512xf32>
    %114 = arith.addf %113, %17 : vector<8x512xf32>
    %115 = arith.mulf %63, %20 : vector<8x512xf32>
    %116 = arith.addf %115, %23 : vector<8x512xf32>
    %cst_35 = arith.constant 2.300000e+00 : f32
    %117 = vector.broadcast %cst_35 : f32 to vector<8x512xf32>
    %118 = arith.subf %110, %117 : vector<8x512xf32>
    %cst_36 = arith.constant 0.000000e+00 : f32
    %119 = vector.broadcast %cst_36 : f32 to vector<8x512xf32>
    %120 = arith.cmpf ogt, %118, %119 : vector<8x512xf32>
    %121 = arith.extui %120 : vector<8x512xi1> to vector<8x512xi32>
    %122 = arith.sitofp %121 : vector<8x512xi32> to vector<8x512xf32>
    %123 = arith.truncf %122 : vector<8x512xf32> to vector<8x512xbf16>
    %124 = vector.extract_strided_slice %123 {offsets = [0, 0], sizes = [8, 256], strides = [1, 1]} : vector<8x512xbf16> to vector<8x256xbf16>
    %125 = arith.index_cast %c1_i32 : i32 to index
    %c0_37 = arith.constant 0 : index
    %c0_38 = arith.constant 0 : index
    %c0_39 = arith.constant 0 : index
    %126 = vector.load %arg5[%125, %c0_37, %c0_38, %c0_39] : memref<8x2x8x256xbf16, #tpu.memory_space<vmem>>, vector<1x1x8x256xbf16>
    %127 = vector.shape_cast %126 : vector<1x1x8x256xbf16> to vector<8x256xbf16>
    %128 = vector.shape_cast %124 : vector<8x256xbf16> to vector<1x1x8x256xbf16>
    tpu.vector_store %arg5[%125, %c0_37, %c0_38, %c0_39], %128 {strides = array<i32>} : memref<8x2x8x256xbf16, #tpu.memory_space<vmem>>, vector<1x1x8x256xbf16>,
    %129 = vector.extract_strided_slice %123 {offsets = [0, 256], sizes = [8, 256], strides = [1, 1]} : vector<8x512xbf16> to vector<8x256xbf16>
    %130 = arith.index_cast %c1_i32 : i32 to index
    %c1_40 = arith.constant 1 : index
    %c0_41 = arith.constant 0 : index
    %c0_42 = arith.constant 0 : index
    %131 = vector.load %arg5[%130, %c1_40, %c0_41, %c0_42] : memref<8x2x8x256xbf16, #tpu.memory_space<vmem>>, vector<1x1x8x256xbf16>
    %132 = vector.shape_cast %131 : vector<1x1x8x256xbf16> to vector<8x256xbf16>
    %133 = vector.shape_cast %129 : vector<8x256xbf16> to vector<1x1x8x256xbf16>
    tpu.vector_store %arg5[%130, %c1_40, %c0_41, %c0_42], %133 {strides = array<i32>} : memref<8x2x8x256xbf16, #tpu.memory_space<vmem>>, vector<1x1x8x256xbf16>,
    %c2_i32 = arith.constant 2 : i32
    %c512_i32_43 = arith.constant 512 : i32
    %134 = arith.muli %c2_i32, %c512_i32_43 : i32
    %135 = tpu.assume_multiple %134, 128 : i32
    %c0_44 = arith.constant 0 : index
    %136 = arith.index_cast %135 : i32 to index
    %137 = vector.load %arg6[%c0_44, %136] : memref<8x4096xf32, #tpu.memory_space<vmem>>, vector<8x512xf32>
    %138 = arith.addf %137, %26 : vector<8x512xf32>
    %139 = arith.mulf %114, %114 : vector<8x512xf32>
    %140 = arith.mulf %139, %114 : vector<8x512xf32>
    %141 = arith.mulf %112, %112 : vector<8x512xf32>
    %142 = arith.mulf %116, %140 : vector<8x512xf32>
    %cst_45 = arith.constant 1.200000e+02 : f32
    %143 = vector.broadcast %cst_45 : f32 to vector<8x512xf32>
    %144 = arith.mulf %143, %142 : vector<8x512xf32>
    %cst_46 = arith.constant 1.150000e+02 : f32
    %145 = vector.broadcast %cst_46 : f32 to vector<8x512xf32>
    %146 = arith.subf %110, %145 : vector<8x512xf32>
    %147 = arith.mulf %144, %146 : vector<8x512xf32>
    %148 = arith.mulf %141, %141 : vector<8x512xf32>
    %cst_47 = arith.constant 3.600000e+01 : f32
    %149 = vector.broadcast %cst_47 : f32 to vector<8x512xf32>
    %150 = arith.mulf %149, %148 : vector<8x512xf32>
    %cst_48 = arith.constant -1.200000e+01 : f32
    %151 = vector.broadcast %cst_48 : f32 to vector<8x512xf32>
    %152 = arith.subf %110, %151 : vector<8x512xf32>
    %153 = arith.mulf %150, %152 : vector<8x512xf32>
    %cst_49 = arith.constant 1.060000e+01 : f32
    %154 = vector.broadcast %cst_49 : f32 to vector<8x512xf32>
    %155 = arith.subf %110, %154 : vector<8x512xf32>
    %cst_50 = arith.constant 3.000000e-01 : f32
    %156 = vector.broadcast %cst_50 : f32 to vector<8x512xf32>
    %157 = arith.mulf %156, %155 : vector<8x512xf32>
    %158 = arith.subf %138, %147 : vector<8x512xf32>
    %159 = arith.subf %158, %153 : vector<8x512xf32>
    %160 = arith.subf %159, %157 : vector<8x512xf32>
    %cst_51 = arith.constant 1.000000e-01 : f32
    %161 = vector.broadcast %cst_51 : f32 to vector<8x512xf32>
    %162 = arith.mulf %160, %161 : vector<8x512xf32>
    %163 = arith.addf %110, %162 : vector<8x512xf32>
    %164 = arith.mulf %112, %8 : vector<8x512xf32>
    %165 = arith.addf %164, %11 : vector<8x512xf32>
    %166 = arith.mulf %114, %14 : vector<8x512xf32>
    %167 = arith.addf %166, %17 : vector<8x512xf32>
    %168 = arith.mulf %116, %20 : vector<8x512xf32>
    %169 = arith.addf %168, %23 : vector<8x512xf32>
    %cst_52 = arith.constant 2.300000e+00 : f32
    %170 = vector.broadcast %cst_52 : f32 to vector<8x512xf32>
    %171 = arith.subf %163, %170 : vector<8x512xf32>
    %cst_53 = arith.constant 0.000000e+00 : f32
    %172 = vector.broadcast %cst_53 : f32 to vector<8x512xf32>
    %173 = arith.cmpf ogt, %171, %172 : vector<8x512xf32>
    %174 = arith.extui %173 : vector<8x512xi1> to vector<8x512xi32>
    %175 = arith.sitofp %174 : vector<8x512xi32> to vector<8x512xf32>
    %176 = arith.truncf %175 : vector<8x512xf32> to vector<8x512xbf16>
    %177 = vector.extract_strided_slice %176 {offsets = [0, 0], sizes = [8, 256], strides = [1, 1]} : vector<8x512xbf16> to vector<8x256xbf16>
    %178 = arith.index_cast %c2_i32 : i32 to index
    %c0_54 = arith.constant 0 : index
    %c0_55 = arith.constant 0 : index
    %c0_56 = arith.constant 0 : index
    %179 = vector.load %arg5[%178, %c0_54, %c0_55, %c0_56] : memref<8x2x8x256xbf16, #tpu.memory_space<vmem>>, vector<1x1x8x256xbf16>
    %180 = vector.shape_cast %179 : vector<1x1x8x256xbf16> to vector<8x256xbf16>
    %181 = vector.shape_cast %177 : vector<8x256xbf16> to vector<1x1x8x256xbf16>
    tpu.vector_store %arg5[%178, %c0_54, %c0_55, %c0_56], %181 {strides = array<i32>} : memref<8x2x8x256xbf16, #tpu.memory_space<vmem>>, vector<1x1x8x256xbf16>,
    %182 = vector.extract_strided_slice %176 {offsets = [0, 256], sizes = [8, 256], strides = [1, 1]} : vector<8x512xbf16> to vector<8x256xbf16>
    %183 = arith.index_cast %c2_i32 : i32 to index
    %c1_57 = arith.constant 1 : index
    %c0_58 = arith.constant 0 : index
    %c0_59 = arith.constant 0 : index
    %184 = vector.load %arg5[%183, %c1_57, %c0_58, %c0_59] : memref<8x2x8x256xbf16, #tpu.memory_space<vmem>>, vector<1x1x8x256xbf16>
    %185 = vector.shape_cast %184 : vector<1x1x8x256xbf16> to vector<8x256xbf16>
    %186 = vector.shape_cast %182 : vector<8x256xbf16> to vector<1x1x8x256xbf16>
    tpu.vector_store %arg5[%183, %c1_57, %c0_58, %c0_59], %186 {strides = array<i32>} : memref<8x2x8x256xbf16, #tpu.memory_space<vmem>>, vector<1x1x8x256xbf16>,
    %c3_i32 = arith.constant 3 : i32
    %c512_i32_60 = arith.constant 512 : i32
    %187 = arith.muli %c3_i32, %c512_i32_60 : i32
    %188 = tpu.assume_multiple %187, 128 : i32
    %c0_61 = arith.constant 0 : index
    %189 = arith.index_cast %188 : i32 to index
    %190 = vector.load %arg6[%c0_61, %189] : memref<8x4096xf32, #tpu.memory_space<vmem>>, vector<8x512xf32>
    %191 = arith.addf %190, %26 : vector<8x512xf32>
    %192 = arith.mulf %167, %167 : vector<8x512xf32>
    %193 = arith.mulf %192, %167 : vector<8x512xf32>
    %194 = arith.mulf %165, %165 : vector<8x512xf32>
    %195 = arith.mulf %169, %193 : vector<8x512xf32>
    %cst_62 = arith.constant 1.200000e+02 : f32
    %196 = vector.broadcast %cst_62 : f32 to vector<8x512xf32>
    %197 = arith.mulf %196, %195 : vector<8x512xf32>
    %cst_63 = arith.constant 1.150000e+02 : f32
    %198 = vector.broadcast %cst_63 : f32 to vector<8x512xf32>
    %199 = arith.subf %163, %198 : vector<8x512xf32>
    %200 = arith.mulf %197, %199 : vector<8x512xf32>
    %201 = arith.mulf %194, %194 : vector<8x512xf32>
    %cst_64 = arith.constant 3.600000e+01 : f32
    %202 = vector.broadcast %cst_64 : f32 to vector<8x512xf32>
    %203 = arith.mulf %202, %201 : vector<8x512xf32>
    %cst_65 = arith.constant -1.200000e+01 : f32
    %204 = vector.broadcast %cst_65 : f32 to vector<8x512xf32>
    %205 = arith.subf %163, %204 : vector<8x512xf32>
    %206 = arith.mulf %203, %205 : vector<8x512xf32>
    %cst_66 = arith.constant 1.060000e+01 : f32
    %207 = vector.broadcast %cst_66 : f32 to vector<8x512xf32>
    %208 = arith.subf %163, %207 : vector<8x512xf32>
    %cst_67 = arith.constant 3.000000e-01 : f32
    %209 = vector.broadcast %cst_67 : f32 to vector<8x512xf32>
    %210 = arith.mulf %209, %208 : vector<8x512xf32>
    %211 = arith.subf %191, %200 : vector<8x512xf32>
    %212 = arith.subf %211, %206 : vector<8x512xf32>
    %213 = arith.subf %212, %210 : vector<8x512xf32>
    %cst_68 = arith.constant 1.000000e-01 : f32
    %214 = vector.broadcast %cst_68 : f32 to vector<8x512xf32>
    %215 = arith.mulf %213, %214 : vector<8x512xf32>
    %216 = arith.addf %163, %215 : vector<8x512xf32>
    %217 = arith.mulf %165, %8 : vector<8x512xf32>
    %218 = arith.addf %217, %11 : vector<8x512xf32>
    %219 = arith.mulf %167, %14 : vector<8x512xf32>
    %220 = arith.addf %219, %17 : vector<8x512xf32>
    %221 = arith.mulf %169, %20 : vector<8x512xf32>
    %222 = arith.addf %221, %23 : vector<8x512xf32>
    %cst_69 = arith.constant 2.300000e+00 : f32
    %223 = vector.broadcast %cst_69 : f32 to vector<8x512xf32>
    %224 = arith.subf %216, %223 : vector<8x512xf32>
    %cst_70 = arith.constant 0.000000e+00 : f32
    %225 = vector.broadcast %cst_70 : f32 to vector<8x512xf32>
    %226 = arith.cmpf ogt, %224, %225 : vector<8x512xf32>
    %227 = arith.extui %226 : vector<8x512xi1> to vector<8x512xi32>
    %228 = arith.sitofp %227 : vector<8x512xi32> to vector<8x512xf32>
    %229 = arith.truncf %228 : vector<8x512xf32> to vector<8x512xbf16>
    %230 = vector.extract_strided_slice %229 {offsets = [0, 0], sizes = [8, 256], strides = [1, 1]} : vector<8x512xbf16> to vector<8x256xbf16>
    %231 = arith.index_cast %c3_i32 : i32 to index
    %c0_71 = arith.constant 0 : index
    %c0_72 = arith.constant 0 : index
    %c0_73 = arith.constant 0 : index
    %232 = vector.load %arg5[%231, %c0_71, %c0_72, %c0_73] : memref<8x2x8x256xbf16, #tpu.memory_space<vmem>>, vector<1x1x8x256xbf16>
    %233 = vector.shape_cast %232 : vector<1x1x8x256xbf16> to vector<8x256xbf16>
    %234 = vector.shape_cast %230 : vector<8x256xbf16> to vector<1x1x8x256xbf16>
    tpu.vector_store %arg5[%231, %c0_71, %c0_72, %c0_73], %234 {strides = array<i32>} : memref<8x2x8x256xbf16, #tpu.memory_space<vmem>>, vector<1x1x8x256xbf16>,
    %235 = vector.extract_strided_slice %229 {offsets = [0, 256], sizes = [8, 256], strides = [1, 1]} : vector<8x512xbf16> to vector<8x256xbf16>
    %236 = arith.index_cast %c3_i32 : i32 to index
    %c1_74 = arith.constant 1 : index
    %c0_75 = arith.constant 0 : index
    %c0_76 = arith.constant 0 : index
    %237 = vector.load %arg5[%236, %c1_74, %c0_75, %c0_76] : memref<8x2x8x256xbf16, #tpu.memory_space<vmem>>, vector<1x1x8x256xbf16>
    %238 = vector.shape_cast %237 : vector<1x1x8x256xbf16> to vector<8x256xbf16>
    %239 = vector.shape_cast %235 : vector<8x256xbf16> to vector<1x1x8x256xbf16>
    tpu.vector_store %arg5[%236, %c1_74, %c0_75, %c0_76], %239 {strides = array<i32>} : memref<8x2x8x256xbf16, #tpu.memory_space<vmem>>, vector<1x1x8x256xbf16>,
    %c4_i32 = arith.constant 4 : i32
    %c512_i32_77 = arith.constant 512 : i32
    %240 = arith.muli %c4_i32, %c512_i32_77 : i32
    %241 = tpu.assume_multiple %240, 128 : i32
    %c0_78 = arith.constant 0 : index
    %242 = arith.index_cast %241 : i32 to index
    %243 = vector.load %arg6[%c0_78, %242] : memref<8x4096xf32, #tpu.memory_space<vmem>>, vector<8x512xf32>
    %244 = arith.addf %243, %26 : vector<8x512xf32>
    %245 = arith.mulf %220, %220 : vector<8x512xf32>
    %246 = arith.mulf %245, %220 : vector<8x512xf32>
    %247 = arith.mulf %218, %218 : vector<8x512xf32>
    %248 = arith.mulf %222, %246 : vector<8x512xf32>
    %cst_79 = arith.constant 1.200000e+02 : f32
    %249 = vector.broadcast %cst_79 : f32 to vector<8x512xf32>
    %250 = arith.mulf %249, %248 : vector<8x512xf32>
    %cst_80 = arith.constant 1.150000e+02 : f32
    %251 = vector.broadcast %cst_80 : f32 to vector<8x512xf32>
    %252 = arith.subf %216, %251 : vector<8x512xf32>
    %253 = arith.mulf %250, %252 : vector<8x512xf32>
    %254 = arith.mulf %247, %247 : vector<8x512xf32>
    %cst_81 = arith.constant 3.600000e+01 : f32
    %255 = vector.broadcast %cst_81 : f32 to vector<8x512xf32>
    %256 = arith.mulf %255, %254 : vector<8x512xf32>
    %cst_82 = arith.constant -1.200000e+01 : f32
    %257 = vector.broadcast %cst_82 : f32 to vector<8x512xf32>
    %258 = arith.subf %216, %257 : vector<8x512xf32>
    %259 = arith.mulf %256, %258 : vector<8x512xf32>
    %cst_83 = arith.constant 1.060000e+01 : f32
    %260 = vector.broadcast %cst_83 : f32 to vector<8x512xf32>
    %261 = arith.subf %216, %260 : vector<8x512xf32>
    %cst_84 = arith.constant 3.000000e-01 : f32
    %262 = vector.broadcast %cst_84 : f32 to vector<8x512xf32>
    %263 = arith.mulf %262, %261 : vector<8x512xf32>
    %264 = arith.subf %244, %253 : vector<8x512xf32>
    %265 = arith.subf %264, %259 : vector<8x512xf32>
    %266 = arith.subf %265, %263 : vector<8x512xf32>
    %cst_85 = arith.constant 1.000000e-01 : f32
    %267 = vector.broadcast %cst_85 : f32 to vector<8x512xf32>
    %268 = arith.mulf %266, %267 : vector<8x512xf32>
    %269 = arith.addf %216, %268 : vector<8x512xf32>
    %270 = arith.mulf %218, %8 : vector<8x512xf32>
    %271 = arith.addf %270, %11 : vector<8x512xf32>
    %272 = arith.mulf %220, %14 : vector<8x512xf32>
    %273 = arith.addf %272, %17 : vector<8x512xf32>
    %274 = arith.mulf %222, %20 : vector<8x512xf32>
    %275 = arith.addf %274, %23 : vector<8x512xf32>
    %cst_86 = arith.constant 2.300000e+00 : f32
    %276 = vector.broadcast %cst_86 : f32 to vector<8x512xf32>
    %277 = arith.subf %269, %276 : vector<8x512xf32>
    %cst_87 = arith.constant 0.000000e+00 : f32
    %278 = vector.broadcast %cst_87 : f32 to vector<8x512xf32>
    %279 = arith.cmpf ogt, %277, %278 : vector<8x512xf32>
    %280 = arith.extui %279 : vector<8x512xi1> to vector<8x512xi32>
    %281 = arith.sitofp %280 : vector<8x512xi32> to vector<8x512xf32>
    %282 = arith.truncf %281 : vector<8x512xf32> to vector<8x512xbf16>
    %283 = vector.extract_strided_slice %282 {offsets = [0, 0], sizes = [8, 256], strides = [1, 1]} : vector<8x512xbf16> to vector<8x256xbf16>
    %284 = arith.index_cast %c4_i32 : i32 to index
    %c0_88 = arith.constant 0 : index
    %c0_89 = arith.constant 0 : index
    %c0_90 = arith.constant 0 : index
    %285 = vector.load %arg5[%284, %c0_88, %c0_89, %c0_90] : memref<8x2x8x256xbf16, #tpu.memory_space<vmem>>, vector<1x1x8x256xbf16>
    %286 = vector.shape_cast %285 : vector<1x1x8x256xbf16> to vector<8x256xbf16>
    %287 = vector.shape_cast %283 : vector<8x256xbf16> to vector<1x1x8x256xbf16>
    tpu.vector_store %arg5[%284, %c0_88, %c0_89, %c0_90], %287 {strides = array<i32>} : memref<8x2x8x256xbf16, #tpu.memory_space<vmem>>, vector<1x1x8x256xbf16>,
    %288 = vector.extract_strided_slice %282 {offsets = [0, 256], sizes = [8, 256], strides = [1, 1]} : vector<8x512xbf16> to vector<8x256xbf16>
    %289 = arith.index_cast %c4_i32 : i32 to index
    %c1_91 = arith.constant 1 : index
    %c0_92 = arith.constant 0 : index
    %c0_93 = arith.constant 0 : index
    %290 = vector.load %arg5[%289, %c1_91, %c0_92, %c0_93] : memref<8x2x8x256xbf16, #tpu.memory_space<vmem>>, vector<1x1x8x256xbf16>
    %291 = vector.shape_cast %290 : vector<1x1x8x256xbf16> to vector<8x256xbf16>
    %292 = vector.shape_cast %288 : vector<8x256xbf16> to vector<1x1x8x256xbf16>
    tpu.vector_store %arg5[%289, %c1_91, %c0_92, %c0_93], %292 {strides = array<i32>} : memref<8x2x8x256xbf16, #tpu.memory_space<vmem>>, vector<1x1x8x256xbf16>,
    %c5_i32 = arith.constant 5 : i32
    %c512_i32_94 = arith.constant 512 : i32
    %293 = arith.muli %c5_i32, %c512_i32_94 : i32
    %294 = tpu.assume_multiple %293, 128 : i32
    %c0_95 = arith.constant 0 : index
    %295 = arith.index_cast %294 : i32 to index
    %296 = vector.load %arg6[%c0_95, %295] : memref<8x4096xf32, #tpu.memory_space<vmem>>, vector<8x512xf32>
    %297 = arith.addf %296, %26 : vector<8x512xf32>
    %298 = arith.mulf %273, %273 : vector<8x512xf32>
    %299 = arith.mulf %298, %273 : vector<8x512xf32>
    %300 = arith.mulf %271, %271 : vector<8x512xf32>
    %301 = arith.mulf %275, %299 : vector<8x512xf32>
    %cst_96 = arith.constant 1.200000e+02 : f32
    %302 = vector.broadcast %cst_96 : f32 to vector<8x512xf32>
    %303 = arith.mulf %302, %301 : vector<8x512xf32>
    %cst_97 = arith.constant 1.150000e+02 : f32
    %304 = vector.broadcast %cst_97 : f32 to vector<8x512xf32>
    %305 = arith.subf %269, %304 : vector<8x512xf32>
    %306 = arith.mulf %303, %305 : vector<8x512xf32>
    %307 = arith.mulf %300, %300 : vector<8x512xf32>
    %cst_98 = arith.constant 3.600000e+01 : f32
    %308 = vector.broadcast %cst_98 : f32 to vector<8x512xf32>
    %309 = arith.mulf %308, %307 : vector<8x512xf32>
    %cst_99 = arith.constant -1.200000e+01 : f32
    %310 = vector.broadcast %cst_99 : f32 to vector<8x512xf32>
    %311 = arith.subf %269, %310 : vector<8x512xf32>
    %312 = arith.mulf %309, %311 : vector<8x512xf32>
    %cst_100 = arith.constant 1.060000e+01 : f32
    %313 = vector.broadcast %cst_100 : f32 to vector<8x512xf32>
    %314 = arith.subf %269, %313 : vector<8x512xf32>
    %cst_101 = arith.constant 3.000000e-01 : f32
    %315 = vector.broadcast %cst_101 : f32 to vector<8x512xf32>
    %316 = arith.mulf %315, %314 : vector<8x512xf32>
    %317 = arith.subf %297, %306 : vector<8x512xf32>
    %318 = arith.subf %317, %312 : vector<8x512xf32>
    %319 = arith.subf %318, %316 : vector<8x512xf32>
    %cst_102 = arith.constant 1.000000e-01 : f32
    %320 = vector.broadcast %cst_102 : f32 to vector<8x512xf32>
    %321 = arith.mulf %319, %320 : vector<8x512xf32>
    %322 = arith.addf %269, %321 : vector<8x512xf32>
    %323 = arith.mulf %271, %8 : vector<8x512xf32>
    %324 = arith.addf %323, %11 : vector<8x512xf32>
    %325 = arith.mulf %273, %14 : vector<8x512xf32>
    %326 = arith.addf %325, %17 : vector<8x512xf32>
    %327 = arith.mulf %275, %20 : vector<8x512xf32>
    %328 = arith.addf %327, %23 : vector<8x512xf32>
    %cst_103 = arith.constant 2.300000e+00 : f32
    %329 = vector.broadcast %cst_103 : f32 to vector<8x512xf32>
    %330 = arith.subf %322, %329 : vector<8x512xf32>
    %cst_104 = arith.constant 0.000000e+00 : f32
    %331 = vector.broadcast %cst_104 : f32 to vector<8x512xf32>
    %332 = arith.cmpf ogt, %330, %331 : vector<8x512xf32>
    %333 = arith.extui %332 : vector<8x512xi1> to vector<8x512xi32>
    %334 = arith.sitofp %333 : vector<8x512xi32> to vector<8x512xf32>
    %335 = arith.truncf %334 : vector<8x512xf32> to vector<8x512xbf16>
    %336 = vector.extract_strided_slice %335 {offsets = [0, 0], sizes = [8, 256], strides = [1, 1]} : vector<8x512xbf16> to vector<8x256xbf16>
    %337 = arith.index_cast %c5_i32 : i32 to index
    %c0_105 = arith.constant 0 : index
    %c0_106 = arith.constant 0 : index
    %c0_107 = arith.constant 0 : index
    %338 = vector.load %arg5[%337, %c0_105, %c0_106, %c0_107] : memref<8x2x8x256xbf16, #tpu.memory_space<vmem>>, vector<1x1x8x256xbf16>
    %339 = vector.shape_cast %338 : vector<1x1x8x256xbf16> to vector<8x256xbf16>
    %340 = vector.shape_cast %336 : vector<8x256xbf16> to vector<1x1x8x256xbf16>
    tpu.vector_store %arg5[%337, %c0_105, %c0_106, %c0_107], %340 {strides = array<i32>} : memref<8x2x8x256xbf16, #tpu.memory_space<vmem>>, vector<1x1x8x256xbf16>,
    %341 = vector.extract_strided_slice %335 {offsets = [0, 256], sizes = [8, 256], strides = [1, 1]} : vector<8x512xbf16> to vector<8x256xbf16>
    %342 = arith.index_cast %c5_i32 : i32 to index
    %c1_108 = arith.constant 1 : index
    %c0_109 = arith.constant 0 : index
    %c0_110 = arith.constant 0 : index
    %343 = vector.load %arg5[%342, %c1_108, %c0_109, %c0_110] : memref<8x2x8x256xbf16, #tpu.memory_space<vmem>>, vector<1x1x8x256xbf16>
    %344 = vector.shape_cast %343 : vector<1x1x8x256xbf16> to vector<8x256xbf16>
    %345 = vector.shape_cast %341 : vector<8x256xbf16> to vector<1x1x8x256xbf16>
    tpu.vector_store %arg5[%342, %c1_108, %c0_109, %c0_110], %345 {strides = array<i32>} : memref<8x2x8x256xbf16, #tpu.memory_space<vmem>>, vector<1x1x8x256xbf16>,
    %c6_i32 = arith.constant 6 : i32
    %c512_i32_111 = arith.constant 512 : i32
    %346 = arith.muli %c6_i32, %c512_i32_111 : i32
    %347 = tpu.assume_multiple %346, 128 : i32
    %c0_112 = arith.constant 0 : index
    %348 = arith.index_cast %347 : i32 to index
    %349 = vector.load %arg6[%c0_112, %348] : memref<8x4096xf32, #tpu.memory_space<vmem>>, vector<8x512xf32>
    %350 = arith.addf %349, %26 : vector<8x512xf32>
    %351 = arith.mulf %326, %326 : vector<8x512xf32>
    %352 = arith.mulf %351, %326 : vector<8x512xf32>
    %353 = arith.mulf %324, %324 : vector<8x512xf32>
    %354 = arith.mulf %328, %352 : vector<8x512xf32>
    %cst_113 = arith.constant 1.200000e+02 : f32
    %355 = vector.broadcast %cst_113 : f32 to vector<8x512xf32>
    %356 = arith.mulf %355, %354 : vector<8x512xf32>
    %cst_114 = arith.constant 1.150000e+02 : f32
    %357 = vector.broadcast %cst_114 : f32 to vector<8x512xf32>
    %358 = arith.subf %322, %357 : vector<8x512xf32>
    %359 = arith.mulf %356, %358 : vector<8x512xf32>
    %360 = arith.mulf %353, %353 : vector<8x512xf32>
    %cst_115 = arith.constant 3.600000e+01 : f32
    %361 = vector.broadcast %cst_115 : f32 to vector<8x512xf32>
    %362 = arith.mulf %361, %360 : vector<8x512xf32>
    %cst_116 = arith.constant -1.200000e+01 : f32
    %363 = vector.broadcast %cst_116 : f32 to vector<8x512xf32>
    %364 = arith.subf %322, %363 : vector<8x512xf32>
    %365 = arith.mulf %362, %364 : vector<8x512xf32>
    %cst_117 = arith.constant 1.060000e+01 : f32
    %366 = vector.broadcast %cst_117 : f32 to vector<8x512xf32>
    %367 = arith.subf %322, %366 : vector<8x512xf32>
    %cst_118 = arith.constant 3.000000e-01 : f32
    %368 = vector.broadcast %cst_118 : f32 to vector<8x512xf32>
    %369 = arith.mulf %368, %367 : vector<8x512xf32>
    %370 = arith.subf %350, %359 : vector<8x512xf32>
    %371 = arith.subf %370, %365 : vector<8x512xf32>
    %372 = arith.subf %371, %369 : vector<8x512xf32>
    %cst_119 = arith.constant 1.000000e-01 : f32
    %373 = vector.broadcast %cst_119 : f32 to vector<8x512xf32>
    %374 = arith.mulf %372, %373 : vector<8x512xf32>
    %375 = arith.addf %322, %374 : vector<8x512xf32>
    %376 = arith.mulf %324, %8 : vector<8x512xf32>
    %377 = arith.addf %376, %11 : vector<8x512xf32>
    %378 = arith.mulf %326, %14 : vector<8x512xf32>
    %379 = arith.addf %378, %17 : vector<8x512xf32>
    %380 = arith.mulf %328, %20 : vector<8x512xf32>
    %381 = arith.addf %380, %23 : vector<8x512xf32>
    %cst_120 = arith.constant 2.300000e+00 : f32
    %382 = vector.broadcast %cst_120 : f32 to vector<8x512xf32>
    %383 = arith.subf %375, %382 : vector<8x512xf32>
    %cst_121 = arith.constant 0.000000e+00 : f32
    %384 = vector.broadcast %cst_121 : f32 to vector<8x512xf32>
    %385 = arith.cmpf ogt, %383, %384 : vector<8x512xf32>
    %386 = arith.extui %385 : vector<8x512xi1> to vector<8x512xi32>
    %387 = arith.sitofp %386 : vector<8x512xi32> to vector<8x512xf32>
    %388 = arith.truncf %387 : vector<8x512xf32> to vector<8x512xbf16>
    %389 = vector.extract_strided_slice %388 {offsets = [0, 0], sizes = [8, 256], strides = [1, 1]} : vector<8x512xbf16> to vector<8x256xbf16>
    %390 = arith.index_cast %c6_i32 : i32 to index
    %c0_122 = arith.constant 0 : index
    %c0_123 = arith.constant 0 : index
    %c0_124 = arith.constant 0 : index
    %391 = vector.load %arg5[%390, %c0_122, %c0_123, %c0_124] : memref<8x2x8x256xbf16, #tpu.memory_space<vmem>>, vector<1x1x8x256xbf16>
    %392 = vector.shape_cast %391 : vector<1x1x8x256xbf16> to vector<8x256xbf16>
    %393 = vector.shape_cast %389 : vector<8x256xbf16> to vector<1x1x8x256xbf16>
    tpu.vector_store %arg5[%390, %c0_122, %c0_123, %c0_124], %393 {strides = array<i32>} : memref<8x2x8x256xbf16, #tpu.memory_space<vmem>>, vector<1x1x8x256xbf16>,
    %394 = vector.extract_strided_slice %388 {offsets = [0, 256], sizes = [8, 256], strides = [1, 1]} : vector<8x512xbf16> to vector<8x256xbf16>
    %395 = arith.index_cast %c6_i32 : i32 to index
    %c1_125 = arith.constant 1 : index
    %c0_126 = arith.constant 0 : index
    %c0_127 = arith.constant 0 : index
    %396 = vector.load %arg5[%395, %c1_125, %c0_126, %c0_127] : memref<8x2x8x256xbf16, #tpu.memory_space<vmem>>, vector<1x1x8x256xbf16>
    %397 = vector.shape_cast %396 : vector<1x1x8x256xbf16> to vector<8x256xbf16>
    %398 = vector.shape_cast %394 : vector<8x256xbf16> to vector<1x1x8x256xbf16>
    tpu.vector_store %arg5[%395, %c1_125, %c0_126, %c0_127], %398 {strides = array<i32>} : memref<8x2x8x256xbf16, #tpu.memory_space<vmem>>, vector<1x1x8x256xbf16>,
    %c7_i32 = arith.constant 7 : i32
    %c512_i32_128 = arith.constant 512 : i32
    %399 = arith.muli %c7_i32, %c512_i32_128 : i32
    %400 = tpu.assume_multiple %399, 128 : i32
    %c0_129 = arith.constant 0 : index
    %401 = arith.index_cast %400 : i32 to index
    %402 = vector.load %arg6[%c0_129, %401] : memref<8x4096xf32, #tpu.memory_space<vmem>>, vector<8x512xf32>
    %403 = arith.addf %402, %26 : vector<8x512xf32>
    %404 = arith.mulf %379, %379 : vector<8x512xf32>
    %405 = arith.mulf %404, %379 : vector<8x512xf32>
    %406 = arith.mulf %377, %377 : vector<8x512xf32>
    %407 = arith.mulf %381, %405 : vector<8x512xf32>
    %cst_130 = arith.constant 1.200000e+02 : f32
    %408 = vector.broadcast %cst_130 : f32 to vector<8x512xf32>
    %409 = arith.mulf %408, %407 : vector<8x512xf32>
    %cst_131 = arith.constant 1.150000e+02 : f32
    %410 = vector.broadcast %cst_131 : f32 to vector<8x512xf32>
    %411 = arith.subf %375, %410 : vector<8x512xf32>
    %412 = arith.mulf %409, %411 : vector<8x512xf32>
    %413 = arith.mulf %406, %406 : vector<8x512xf32>
    %cst_132 = arith.constant 3.600000e+01 : f32
    %414 = vector.broadcast %cst_132 : f32 to vector<8x512xf32>
    %415 = arith.mulf %414, %413 : vector<8x512xf32>
    %cst_133 = arith.constant -1.200000e+01 : f32
    %416 = vector.broadcast %cst_133 : f32 to vector<8x512xf32>
    %417 = arith.subf %375, %416 : vector<8x512xf32>
    %418 = arith.mulf %415, %417 : vector<8x512xf32>
    %cst_134 = arith.constant 1.060000e+01 : f32
    %419 = vector.broadcast %cst_134 : f32 to vector<8x512xf32>
    %420 = arith.subf %375, %419 : vector<8x512xf32>
    %cst_135 = arith.constant 3.000000e-01 : f32
    %421 = vector.broadcast %cst_135 : f32 to vector<8x512xf32>
    %422 = arith.mulf %421, %420 : vector<8x512xf32>
    %423 = arith.subf %403, %412 : vector<8x512xf32>
    %424 = arith.subf %423, %418 : vector<8x512xf32>
    %425 = arith.subf %424, %422 : vector<8x512xf32>
    %cst_136 = arith.constant 1.000000e-01 : f32
    %426 = vector.broadcast %cst_136 : f32 to vector<8x512xf32>
    %427 = arith.mulf %425, %426 : vector<8x512xf32>
    %428 = arith.addf %375, %427 : vector<8x512xf32>
    %429 = arith.mulf %377, %8 : vector<8x512xf32>
    %430 = arith.addf %429, %11 : vector<8x512xf32>
    %431 = arith.mulf %379, %14 : vector<8x512xf32>
    %432 = arith.addf %431, %17 : vector<8x512xf32>
    %433 = arith.mulf %381, %20 : vector<8x512xf32>
    %434 = arith.addf %433, %23 : vector<8x512xf32>
    %cst_137 = arith.constant 2.300000e+00 : f32
    %435 = vector.broadcast %cst_137 : f32 to vector<8x512xf32>
    %436 = arith.subf %428, %435 : vector<8x512xf32>
    %cst_138 = arith.constant 0.000000e+00 : f32
    %437 = vector.broadcast %cst_138 : f32 to vector<8x512xf32>
    %438 = arith.cmpf ogt, %436, %437 : vector<8x512xf32>
    %439 = arith.extui %438 : vector<8x512xi1> to vector<8x512xi32>
    %440 = arith.sitofp %439 : vector<8x512xi32> to vector<8x512xf32>
    %441 = arith.truncf %440 : vector<8x512xf32> to vector<8x512xbf16>
    %442 = vector.extract_strided_slice %441 {offsets = [0, 0], sizes = [8, 256], strides = [1, 1]} : vector<8x512xbf16> to vector<8x256xbf16>
    %443 = arith.index_cast %c7_i32 : i32 to index
    %c0_139 = arith.constant 0 : index
    %c0_140 = arith.constant 0 : index
    %c0_141 = arith.constant 0 : index
    %444 = vector.load %arg5[%443, %c0_139, %c0_140, %c0_141] : memref<8x2x8x256xbf16, #tpu.memory_space<vmem>>, vector<1x1x8x256xbf16>
    %445 = vector.shape_cast %444 : vector<1x1x8x256xbf16> to vector<8x256xbf16>
    %446 = vector.shape_cast %442 : vector<8x256xbf16> to vector<1x1x8x256xbf16>
    tpu.vector_store %arg5[%443, %c0_139, %c0_140, %c0_141], %446 {strides = array<i32>} : memref<8x2x8x256xbf16, #tpu.memory_space<vmem>>, vector<1x1x8x256xbf16>,
    %447 = vector.extract_strided_slice %441 {offsets = [0, 256], sizes = [8, 256], strides = [1, 1]} : vector<8x512xbf16> to vector<8x256xbf16>
    %448 = arith.index_cast %c7_i32 : i32 to index
    %c1_142 = arith.constant 1 : index
    %c0_143 = arith.constant 0 : index
    %c0_144 = arith.constant 0 : index
    %449 = vector.load %arg5[%448, %c1_142, %c0_143, %c0_144] : memref<8x2x8x256xbf16, #tpu.memory_space<vmem>>, vector<1x1x8x256xbf16>
    %450 = vector.shape_cast %449 : vector<1x1x8x256xbf16> to vector<8x256xbf16>
    %451 = vector.shape_cast %447 : vector<8x256xbf16> to vector<1x1x8x256xbf16>
    tpu.vector_store %arg5[%448, %c1_142, %c0_143, %c0_144], %451 {strides = array<i32>} : memref<8x2x8x256xbf16, #tpu.memory_space<vmem>>, vector<1x1x8x256xbf16>,
    %c8_i32 = arith.constant 8 : i32
    return
  }
  func.func @transform_0(%arg0: i32) -> (i32, i32, i32) {
    %c0_i32 = arith.constant 0 : i32
    %c0_i32_0 = arith.constant 0 : i32
    %c0_i32_1 = arith.constant 0 : i32
    return %arg0, %c0_i32, %c0_i32_0 : i32, i32, i32
  }
  func.func @transform_1(%arg0: i32) -> (i32, i32) {
    %c0_i32 = arith.constant 0 : i32
    %c0_i32_0 = arith.constant 0 : i32
    %c0_i32_1 = arith.constant 0 : i32
    return %c0_i32, %c0_i32_0 : i32, i32
  }
  func.func @transform_2(%arg0: i32) -> (i32, i32) {
    %c0_i32 = arith.constant 0 : i32
    %c0_i32_0 = arith.constant 0 : i32
    %c0_i32_1 = arith.constant 0 : i32
    return %c0_i32, %c0_i32_0 : i32, i32
  }
  func.func @transform_3(%arg0: i32) -> (i32, i32) {
    %c0_i32 = arith.constant 0 : i32
    %c0_i32_0 = arith.constant 0 : i32
    %c0_i32_1 = arith.constant 0 : i32
    return %c0_i32, %c0_i32_0 : i32, i32
  }
  func.func @transform_4(%arg0: i32) -> (i32, i32, i32, i32) {
    %c0_i32 = arith.constant 0 : i32
    %c0_i32_0 = arith.constant 0 : i32
    %c0_i32_1 = arith.constant 0 : i32
    %c0_i32_2 = arith.constant 0 : i32
    return %c0_i32, %arg0, %c0_i32_0, %c0_i32_1 : i32, i32, i32, i32
  }
}

</mosaic_0001>

<llo_original>
// kernel: tpu_custom_call.1
$region0: #{tpu_custom_call.1}
  #allocation0 [shape = 'u32[]', space=smem, size = 0x4, offset = 0x4, fixed_abs, tag = 'smem constant byte address 0x4 - core index']
  #allocation1 [shape = 'u32[72,128]{1,0:T(1,128)}', space=vmem, size = 0x9000, scoped, tag = 'internal scratch']
  #allocation2 [shape = 'f32[8,4096]{1,0:T(8,128)}', space=vmem, size = 0x20000, scoped, tag = 'scratch operand']
  %s0 = inlined_call_operand.hbm [shape: f32[1,32,4096], index: 0, kind: input, shape index: {}]
  %s1 = inlined_call_operand.vmem [shape: f32[8,32], index: 1, kind: input, shape index: {}]
  %s2 = inlined_call_operand.vmem [shape: f32[8,1], index: 2, kind: input, shape index: {}]
  %s3 = inlined_call_operand.hbm [shape: f32[8,512], index: 3, kind: input, shape index: {}]
  %s4 = inlined_call_operand.hbm [shape: bf16[8,2,8,256], index: 4, kind: output, shape index: {}]
  %s5 = sld [smem:[#allocation0]]
  $region34: #{tpu_custom_call.1} parent=0
    _
  %s7 = ssub.s32 1, %s5
  %s8 = scalar_select 0, %s7, %s5
  $region1: #{tpu_custom_call.1} parent=0
    #allocation3 [shape = 'u8[524288]{0}', space=vmem, size = 0x80000, scoped, tag = 'input window, operand 0, single buffered']
    #allocation4 [shape = 's32[1]{0}', space=sflag, size = 0x4, scoped, tag = 'scoped memory for tpu_custom_call.1']
    #allocation5 [shape = 's32[1]{0}', space=sflag, size = 0x4, scoped, tag = 'scoped memory for tpu_custom_call.1']
    #allocation6 [shape = 'u8[16384]{0}', space=vmem, size = 0x4000, scoped, tag = 'input window, operand 3, single buffered']
    #allocation7 [shape = 's32[1]{0}', space=sflag, size = 0x4, scoped, tag = 'scoped memory for tpu_custom_call.1']
    #allocation8 [shape = 'u8[65536]{0}', space=vmem, size = 0x10000, scoped, tag = 'output window, operand 0, single buffered']
    %9 = vsyncpa [#allocation4], 0
    %10 = vsyncpa [#allocation7], 0
    %11 = vsyncpa [#allocation5], 0
    // Predicated region
    $region2: #{tpu_custom_call.1} parent=1 // pred_check
      _
    $region3: #{tpu_custom_call.1} parent=1 // pred_check_branch
      %13 = sbr.rel (0) target = $region5
    $region4: #{tpu_custom_call.1} parent=1 // pred_region
      %15 = vsyncadd [#allocation4], 0
      %s16 = sshll.u32 %s0, 4
      %s17 = int_to_ptr.hbm [resolvable:$true] %s16
      %s18 = sshll.u32 [#allocation3], 4
      %s19 = int_to_ptr.vmem [resolvable:$true] %s18
      %24 = dma.hbm_to_vmem [thread:$0]  %s17, 16384, %s19, [#allocation4], 4096, 4096, 256
    $region5: #{tpu_custom_call.1} parent=1 // pred_fallthru
      _
    // Predicated region
    $region6: #{tpu_custom_call.1} parent=1 // pred_check
      _
    $region7: #{tpu_custom_call.1} parent=1 // pred_check_branch
      %26 = sbr.rel (0) target = $region9
    $region8: #{tpu_custom_call.1} parent=1 // pred_region
      _
    $region9: #{tpu_custom_call.1} parent=1 // pred_fallthru
      _
    // Predicated region
    $region10: #{tpu_custom_call.1} parent=1 // pred_check
      _
    $region11: #{tpu_custom_call.1} parent=1 // pred_check_branch
      %28 = sbr.rel (0) target = $region13
    $region12: #{tpu_custom_call.1} parent=1 // pred_region
      _
    $region13: #{tpu_custom_call.1} parent=1 // pred_fallthru
      _
    // Predicated region
    $region14: #{tpu_custom_call.1} parent=1 // pred_check
      _
    $region15: #{tpu_custom_call.1} parent=1 // pred_check_branch
      %30 = sbr.rel (0) target = $region17
    $region16: #{tpu_custom_call.1} parent=1 // pred_region
      %32 = vsyncadd [#allocation7], 0
      %s34 = sshll.u32 %s3, 4
      %s35 = int_to_ptr.hbm [resolvable:$true] %s34
      %s36 = sshll.u32 [#allocation6], 4
      %s37 = int_to_ptr.vmem [resolvable:$true] %s36
      %39 = dma.hbm_to_vmem [thread:$0]  %s35, 512, %s37, [#allocation7]
    $region17: #{tpu_custom_call.1} parent=1 // pred_fallthru
      _
    // Predicated region
    $region18: #{tpu_custom_call.1} parent=1 // pred_check
      _
    $region19: #{tpu_custom_call.1} parent=1 // pred_check_branch
      %41 = sbr.rel (0) target = $region21
    $region20: #{tpu_custom_call.1} parent=1 // pred_region
      %43 = dma.done [#allocation4], 16384
    $region21: #{tpu_custom_call.1} parent=1 // pred_fallthru
      _
    // Predicated region
    $region22: #{tpu_custom_call.1} parent=1 // pred_check
      _
    $region23: #{tpu_custom_call.1} parent=1 // pred_check_branch
      %45 = sbr.rel (0) target = $region25
    $region24: #{tpu_custom_call.1} parent=1 // pred_region
      %47 = dma.done [#allocation7], 512
    $region25: #{tpu_custom_call.1} parent=1 // pred_fallthru
      _
    %v48 = vld [vmem:[%s1] sm:$0xff]
    %v49 = vld [vmem:[#allocation3] sm:$0xff]
    %v50 = vld [vmem:[#allocation3 + $0x8] sm:$0xff]
    %v51 = vld [vmem:[#allocation3 + $0x10] sm:$0xff]
    %v52 = vld [vmem:[#allocation3 + $0x18] sm:$0xff]
    %v53 = vld [vmem:[#allocation3 + $0x20] sm:$0xff]
    %v54 = vld [vmem:[#allocation3 + $0x28] sm:$0xff]
    %v55 = vld [vmem:[#allocation3 + $0x30] sm:$0xff]
    %v56 = vld [vmem:[#allocation3 + $0x38] sm:$0xff]
    %v57 = vld [vmem:[#allocation3 + $0x40] sm:$0xff]
    %v58 = vld [vmem:[#allocation3 + $0x48] sm:$0xff]
    %v59 = vld [vmem:[#allocation3 + $0x50] sm:$0xff]
    %v60 = vld [vmem:[#allocation3 + $0x58] sm:$0xff]
    %v61 = vld [vmem:[#allocation3 + $0x60] sm:$0xff]
    %v62 = vld [vmem:[#allocation3 + $0x68] sm:$0xff]
    %v63 = vld [vmem:[#allocation3 + $0x70] sm:$0xff]
    %v64 = vld [vmem:[#allocation3 + $0x78] sm:$0xff]
    %v65 = vld [vmem:[#allocation3 + $0x80] sm:$0xff]
    %v66 = vld [vmem:[#allocation3 + $0x88] sm:$0xff]
    %v67 = vld [vmem:[#allocation3 + $0x90] sm:$0xff]
    %v68 = vld [vmem:[#allocation3 + $0x98] sm:$0xff]
    %v69 = vld [vmem:[#allocation3 + $0xa0] sm:$0xff]
    %v70 = vld [vmem:[#allocation3 + $0xa8] sm:$0xff]
    %v71 = vld [vmem:[#allocation3 + $0xb0] sm:$0xff]
    %v72 = vld [vmem:[#allocation3 + $0xb8] sm:$0xff]
    %v73 = vld [vmem:[#allocation3 + $0xc0] sm:$0xff]
    %v74 = vld [vmem:[#allocation3 + $0xc8] sm:$0xff]
    %v75 = vld [vmem:[#allocation3 + $0xd0] sm:$0xff]
    %v76 = vld [vmem:[#allocation3 + $0xd8] sm:$0xff]
    %v77 = vld [vmem:[#allocation3 + $0xe0] sm:$0xff]
    %v78 = vld [vmem:[#allocation3 + $0xe8] sm:$0xff]
    %v79 = vld [vmem:[#allocation3 + $0xf0] sm:$0xff]
    %v80 = vld [vmem:[#allocation3 + $0xf8] sm:$0xff]
    %v81 = vld [vmem:[#allocation3 + $0x100] sm:$0xff]
    %v82 = vld [vmem:[#allocation3 + $0x108] sm:$0xff]
    %v83 = vld [vmem:[#allocation3 + $0x110] sm:$0xff]
    %v84 = vld [vmem:[#allocation3 + $0x118] sm:$0xff]
    %v85 = vld [vmem:[#allocation3 + $0x120] sm:$0xff]
    %v86 = vld [vmem:[#allocation3 + $0x128] sm:$0xff]
    %v87 = vld [vmem:[#allocation3 + $0x130] sm:$0xff]
    %v88 = vld [vmem:[#allocation3 + $0x138] sm:$0xff]
    %v89 = vld [vmem:[#allocation3 + $0x140] sm:$0xff]
    %v90 = vld [vmem:[#allocation3 + $0x148] sm:$0xff]
    %v91 = vld [vmem:[#allocation3 + $0x150] sm:$0xff]
    %v92 = vld [vmem:[#allocation3 + $0x158] sm:$0xff]
    %v93 = vld [vmem:[#allocation3 + $0x160] sm:$0xff]
    %v94 = vld [vmem:[#allocation3 + $0x168] sm:$0xff]
    %v95 = vld [vmem:[#allocation3 + $0x170] sm:$0xff]
    %v96 = vld [vmem:[#allocation3 + $0x178] sm:$0xff]
    %v97 = vld [vmem:[#allocation3 + $0x180] sm:$0xff]
    %v98 = vld [vmem:[#allocation3 + $0x188] sm:$0xff]
    %v99 = vld [vmem:[#allocation3 + $0x190] sm:$0xff]
    %v100 = vld [vmem:[#allocation3 + $0x198] sm:$0xff]
    %v101 = vld [vmem:[#allocation3 + $0x1a0] sm:$0xff]
    %v102 = vld [vmem:[#allocation3 + $0x1a8] sm:$0xff]
    %v103 = vld [vmem:[#allocation3 + $0x1b0] sm:$0xff]
    %v104 = vld [vmem:[#allocation3 + $0x1b8] sm:$0xff]
    %v105 = vld [vmem:[#allocation3 + $0x1c0] sm:$0xff]
    %v106 = vld [vmem:[#allocation3 + $0x1c8] sm:$0xff]
    %v107 = vld [vmem:[#allocation3 + $0x1d0] sm:$0xff]
    %v108 = vld [vmem:[#allocation3 + $0x1d8] sm:$0xff]
    %v109 = vld [vmem:[#allocation3 + $0x1e0] sm:$0xff]
    %v110 = vld [vmem:[#allocation3 + $0x1e8] sm:$0xff]
    %v111 = vld [vmem:[#allocation3 + $0x1f0] sm:$0xff]
    %v112 = vld [vmem:[#allocation3 + $0x1f8] sm:$0xff]
    %v113 = vld [vmem:[#allocation3 + $0x200] sm:$0xff]
    %v114 = vld [vmem:[#allocation3 + $0x208] sm:$0xff]
    %v115 = vld [vmem:[#allocation3 + $0x210] sm:$0xff]
    %v116 = vld [vmem:[#allocation3 + $0x218] sm:$0xff]
    %v117 = vld [vmem:[#allocation3 + $0x220] sm:$0xff]
    %v118 = vld [vmem:[#allocation3 + $0x228] sm:$0xff]
    %v119 = vld [vmem:[#allocation3 + $0x230] sm:$0xff]
    %v120 = vld [vmem:[#allocation3 + $0x238] sm:$0xff]
    %v121 = vld [vmem:[#allocation3 + $0x240] sm:$0xff]
    %v122 = vld [vmem:[#allocation3 + $0x248] sm:$0xff]
    %v123 = vld [vmem:[#allocation3 + $0x250] sm:$0xff]
    %v124 = vld [vmem:[#allocation3 + $0x258] sm:$0xff]
    %v125 = vld [vmem:[#allocation3 + $0x260] sm:$0xff]
    %v126 = vld [vmem:[#allocation3 + $0x268] sm:$0xff]
    %v127 = vld [vmem:[#allocation3 + $0x270] sm:$0xff]
    %v128 = vld [vmem:[#allocation3 + $0x278] sm:$0xff]
    %v129 = vld [vmem:[#allocation3 + $0x280] sm:$0xff]
    %v130 = vld [vmem:[#allocation3 + $0x288] sm:$0xff]
    %v131 = vld [vmem:[#allocation3 + $0x290] sm:$0xff]
    %v132 = vld [vmem:[#allocation3 + $0x298] sm:$0xff]
    %v133 = vld [vmem:[#allocation3 + $0x2a0] sm:$0xff]
    %v134 = vld [vmem:[#allocation3 + $0x2a8] sm:$0xff]
    %v135 = vld [vmem:[#allocation3 + $0x2b0] sm:$0xff]
    %v136 = vld [vmem:[#allocation3 + $0x2b8] sm:$0xff]
    %v137 = vld [vmem:[#allocation3 + $0x2c0] sm:$0xff]
    %v138 = vld [vmem:[#allocation3 + $0x2c8] sm:$0xff]
    %v139 = vld [vmem:[#allocation3 + $0x2d0] sm:$0xff]
    %v140 = vld [vmem:[#allocation3 + $0x2d8] sm:$0xff]
    %v141 = vld [vmem:[#allocation3 + $0x2e0] sm:$0xff]
    %v142 = vld [vmem:[#allocation3 + $0x2e8] sm:$0xff]
    %v143 = vld [vmem:[#allocation3 + $0x2f0] sm:$0xff]
    %v144 = vld [vmem:[#allocation3 + $0x2f8] sm:$0xff]
    %v145 = vld [vmem:[#allocation3 + $0x300] sm:$0xff]
    %v146 = vld [vmem:[#allocation3 + $0x308] sm:$0xff]
    %v147 = vld [vmem:[#allocation3 + $0x310] sm:$0xff]
    %v148 = vld [vmem:[#allocation3 + $0x318] sm:$0xff]
    %v149 = vld [vmem:[#allocation3 + $0x320] sm:$0xff]
    %v150 = vld [vmem:[#allocation3 + $0x328] sm:$0xff]
    %v151 = vld [vmem:[#allocation3 + $0x330] sm:$0xff]
    %v152 = vld [vmem:[#allocation3 + $0x338] sm:$0xff]
    %v153 = vld [vmem:[#allocation3 + $0x340] sm:$0xff]
    %v154 = vld [vmem:[#allocation3 + $0x348] sm:$0xff]
    %v155 = vld [vmem:[#allocation3 + $0x350] sm:$0xff]
    %v156 = vld [vmem:[#allocation3 + $0x358] sm:$0xff]
    %v157 = vld [vmem:[#allocation3 + $0x360] sm:$0xff]
    %v158 = vld [vmem:[#allocation3 + $0x368] sm:$0xff]
    %v159 = vld [vmem:[#allocation3 + $0x370] sm:$0xff]
    %v160 = vld [vmem:[#allocation3 + $0x378] sm:$0xff]
    %v161 = vld [vmem:[#allocation3 + $0x380] sm:$0xff]
    %v162 = vld [vmem:[#allocation3 + $0x388] sm:$0xff]
    %v163 = vld [vmem:[#allocation3 + $0x390] sm:$0xff]
    %v164 = vld [vmem:[#allocation3 + $0x398] sm:$0xff]
    %v165 = vld [vmem:[#allocation3 + $0x3a0] sm:$0xff]
    %v166 = vld [vmem:[#allocation3 + $0x3a8] sm:$0xff]
    %v167 = vld [vmem:[#allocation3 + $0x3b0] sm:$0xff]
    %v168 = vld [vmem:[#allocation3 + $0x3b8] sm:$0xff]
    %v169 = vld [vmem:[#allocation3 + $0x3c0] sm:$0xff]
    %v170 = vld [vmem:[#allocation3 + $0x3c8] sm:$0xff]
    %v171 = vld [vmem:[#allocation3 + $0x3d0] sm:$0xff]
    %v172 = vld [vmem:[#allocation3 + $0x3d8] sm:$0xff]
    %v173 = vld [vmem:[#allocation3 + $0x3e0] sm:$0xff]
    %v174 = vld [vmem:[#allocation3 + $0x3e8] sm:$0xff]
    %v175 = vld [vmem:[#allocation3 + $0x3f0] sm:$0xff]
    %v176 = vld [vmem:[#allocation3 + $0x3f8] sm:$0xff]
    %vm177 = vcmask 261120
    %v179 = vsel %vm177, %v48, 0
    %181 = vmatpush.msra.mxu0 0.0
    %182 = vmatpush.msra.mxu0 0.0
    %183 = vmatpush.msra.mxu0 0.0
    %184 = vmatpush.msra.mxu0 0.0
    %185 = vmatpush.msra.mxu0 0.0
    %186 = vmatpush.msra.mxu0 0.0
    %187 = vmatpush.msra.mxu0 0.0
    %188 = vmatpush.msra.mxu0 0.0
    %189 = vmatpush.msra.mxu0 0.0
    %190 = vmatpush.msra.mxu0 0.0
    %191 = vmatpush.msra.mxu0 0.0
    %192 = vmatpush.msra.mxu0 0.0
    %193 = vmatpush.msra.mxu0 %v145
    %194 = vmatpush.msra.mxu0 %v113
    %195 = vmatpush.msra.mxu0 %v81
    %196 = vmatpush.msra.mxu0 %v49
    %197 = vmatmul.f32.gmra.mxu0 %v179
    %v198 = vpop.f32.mrf.mxu0
    %v199 = vadd.f32 0.0, %v198
    %200 = vdwg.mxu0
    %201 = vmatpush.msra.mxu0 0.0
    %202 = vmatpush.msra.mxu0 0.0
    %203 = vmatpush.msra.mxu0 0.0
    %204 = vmatpush.msra.mxu0 0.0
    %205 = vmatpush.msra.mxu0 0.0
    %206 = vmatpush.msra.mxu0 0.0
    %207 = vmatpush.msra.mxu0 0.0
    %208 = vmatpush.msra.mxu0 0.0
    %209 = vmatpush.msra.mxu0 0.0
    %210 = vmatpush.msra.mxu0 0.0
    %211 = vmatpush.msra.mxu0 0.0
    %212 = vmatpush.msra.mxu0 0.0
    %213 = vmatpush.msra.mxu0 %v146
    %214 = vmatpush.msra.mxu0 %v114
    %215 = vmatpush.msra.mxu0 %v82
    %216 = vmatpush.msra.mxu0 %v50
    %217 = vmatmul.f32.gmra.mxu0 %v179
    %v218 = vpop.f32.mrf.mxu0
    %v219 = vadd.f32 0.0, %v218
    %220 = vdwg.mxu0
    %221 = vmatpush.msra.mxu0 0.0
    %222 = vmatpush.msra.mxu0 0.0
    %223 = vmatpush.msra.mxu0 0.0
    %224 = vmatpush.msra.mxu0 0.0
    %225 = vmatpush.msra.mxu0 0.0
    %226 = vmatpush.msra.mxu0 0.0
    %227 = vmatpush.msra.mxu0 0.0
    %228 = vmatpush.msra.mxu0 0.0
    %229 = vmatpush.msra.mxu0 0.0
    %230 = vmatpush.msra.mxu0 0.0
    %231 = vmatpush.msra.mxu0 0.0
    %232 = vmatpush.msra.mxu0 0.0
    %233 = vmatpush.msra.mxu0 %v147
    %234 = vmatpush.msra.mxu0 %v115
    %235 = vmatpush.msra.mxu0 %v83
    %236 = vmatpush.msra.mxu0 %v51
    %237 = vmatmul.f32.gmra.mxu0 %v179
    %v238 = vpop.f32.mrf.mxu0
    %v239 = vadd.f32 0.0, %v238
    %240 = vdwg.mxu0
    %241 = vmatpush.msra.mxu0 0.0
    %242 = vmatpush.msra.mxu0 0.0
    %243 = vmatpush.msra.mxu0 0.0
    %244 = vmatpush.msra.mxu0 0.0
    %245 = vmatpush.msra.mxu0 0.0
    %246 = vmatpush.msra.mxu0 0.0
    %247 = vmatpush.msra.mxu0 0.0
    %248 = vmatpush.msra.mxu0 0.0
    %249 = vmatpush.msra.mxu0 0.0
    %250 = vmatpush.msra.mxu0 0.0
    %251 = vmatpush.msra.mxu0 0.0
    %252 = vmatpush.msra.mxu0 0.0
    %253 = vmatpush.msra.mxu0 %v148
    %254 = vmatpush.msra.mxu0 %v116
    %255 = vmatpush.msra.mxu0 %v84
    %256 = vmatpush.msra.mxu0 %v52
    %257 = vmatmul.f32.gmra.mxu0 %v179
    %v258 = vpop.f32.mrf.mxu0
    %v259 = vadd.f32 0.0, %v258
    %260 = vdwg.mxu0
    %261 = vmatpush.msra.mxu0 0.0
    %262 = vmatpush.msra.mxu0 0.0
    %263 = vmatpush.msra.mxu0 0.0
    %264 = vmatpush.msra.mxu0 0.0
    %265 = vmatpush.msra.mxu0 0.0
    %266 = vmatpush.msra.mxu0 0.0
    %267 = vmatpush.msra.mxu0 0.0
    %268 = vmatpush.msra.mxu0 0.0
    %269 = vmatpush.msra.mxu0 0.0
    %270 = vmatpush.msra.mxu0 0.0
    %271 = vmatpush.msra.mxu0 0.0
    %272 = vmatpush.msra.mxu0 0.0
    %273 = vmatpush.msra.mxu0 %v149
    %274 = vmatpush.msra.mxu0 %v117
    %275 = vmatpush.msra.mxu0 %v85
    %276 = vmatpush.msra.mxu0 %v53
    %277 = vmatmul.f32.gmra.mxu0 %v179
    %v278 = vpop.f32.mrf.mxu0
    %v279 = vadd.f32 0.0, %v278
    %280 = vdwg.mxu0
    %281 = vmatpush.msra.mxu0 0.0
    %282 = vmatpush.msra.mxu0 0.0
    %283 = vmatpush.msra.mxu0 0.0
    %284 = vmatpush.msra.mxu0 0.0
    %285 = vmatpush.msra.mxu0 0.0
    %286 = vmatpush.msra.mxu0 0.0
    %287 = vmatpush.msra.mxu0 0.0
    %288 = vmatpush.msra.mxu0 0.0
    %289 = vmatpush.msra.mxu0 0.0
    %290 = vmatpush.msra.mxu0 0.0
    %291 = vmatpush.msra.mxu0 0.0
    %292 = vmatpush.msra.mxu0 0.0
    %293 = vmatpush.msra.mxu0 %v150
    %294 = vmatpush.msra.mxu0 %v118
    %295 = vmatpush.msra.mxu0 %v86
    %296 = vmatpush.msra.mxu0 %v54
    %297 = vmatmul.f32.gmra.mxu0 %v179
    %v298 = vpop.f32.mrf.mxu0
    %v299 = vadd.f32 0.0, %v298
    %300 = vdwg.mxu0
    %301 = vmatpush.msra.mxu0 0.0
    %302 = vmatpush.msra.mxu0 0.0
    %303 = vmatpush.msra.mxu0 0.0
    %304 = vmatpush.msra.mxu0 0.0
    %305 = vmatpush.msra.mxu0 0.0
    %306 = vmatpush.msra.mxu0 0.0
    %307 = vmatpush.msra.mxu0 0.0
    %308 = vmatpush.msra.mxu0 0.0
    %309 = vmatpush.msra.mxu0 0.0
    %310 = vmatpush.msra.mxu0 0.0
    %311 = vmatpush.msra.mxu0 0.0
    %312 = vmatpush.msra.mxu0 0.0
    %313 = vmatpush.msra.mxu0 %v151
    %314 = vmatpush.msra.mxu0 %v119
    %315 = vmatpush.msra.mxu0 %v87
    %316 = vmatpush.msra.mxu0 %v55
    %317 = vmatmul.f32.gmra.mxu0 %v179
    %v318 = vpop.f32.mrf.mxu0
    %v319 = vadd.f32 0.0, %v318
    %320 = vdwg.mxu0
    %321 = vmatpush.msra.mxu0 0.0
    %322 = vmatpush.msra.mxu0 0.0
    %323 = vmatpush.msra.mxu0 0.0
    %324 = vmatpush.msra.mxu0 0.0
    %325 = vmatpush.msra.mxu0 0.0
    %326 = vmatpush.msra.mxu0 0.0
    %327 = vmatpush.msra.mxu0 0.0
    %328 = vmatpush.msra.mxu0 0.0
    %329 = vmatpush.msra.mxu0 0.0
    %330 = vmatpush.msra.mxu0 0.0
    %331 = vmatpush.msra.mxu0 0.0
    %332 = vmatpush.msra.mxu0 0.0
    %333 = vmatpush.msra.mxu0 %v152
    %334 = vmatpush.msra.mxu0 %v120
    %335 = vmatpush.msra.mxu0 %v88
    %336 = vmatpush.msra.mxu0 %v56
    %337 = vmatmul.f32.gmra.mxu0 %v179
    %v338 = vpop.f32.mrf.mxu0
    %v339 = vadd.f32 0.0, %v338
    %340 = vdwg.mxu0
    %341 = vmatpush.msra.mxu0 0.0
    %342 = vmatpush.msra.mxu0 0.0
    %343 = vmatpush.msra.mxu0 0.0
    %344 = vmatpush.msra.mxu0 0.0
    %345 = vmatpush.msra.mxu0 0.0
    %346 = vmatpush.msra.mxu0 0.0
    %347 = vmatpush.msra.mxu0 0.0
    %348 = vmatpush.msra.mxu0 0.0
    %349 = vmatpush.msra.mxu0 0.0
    %350 = vmatpush.msra.mxu0 0.0
    %351 = vmatpush.msra.mxu0 0.0
    %352 = vmatpush.msra.mxu0 0.0
    %353 = vmatpush.msra.mxu0 %v153
    %354 = vmatpush.msra.mxu0 %v121
    %355 = vmatpush.msra.mxu0 %v89
    %356 = vmatpush.msra.mxu0 %v57
    %357 = vmatmul.f32.gmra.mxu0 %v179
    %v358 = vpop.f32.mrf.mxu0
    %v359 = vadd.f32 0.0, %v358
    %360 = vdwg.mxu0
    %361 = vmatpush.msra.mxu0 0.0
    %362 = vmatpush.msra.mxu0 0.0
    %363 = vmatpush.msra.mxu0 0.0
    %364 = vmatpush.msra.mxu0 0.0
    %365 = vmatpush.msra.mxu0 0.0
    %366 = vmatpush.msra.mxu0 0.0
    %367 = vmatpush.msra.mxu0 0.0
    %368 = vmatpush.msra.mxu0 0.0
    %369 = vmatpush.msra.mxu0 0.0
    %370 = vmatpush.msra.mxu0 0.0
    %371 = vmatpush.msra.mxu0 0.0
    %372 = vmatpush.msra.mxu0 0.0
    %373 = vmatpush.msra.mxu0 %v154
    %374 = vmatpush.msra.mxu0 %v122
    %375 = vmatpush.msra.mxu0 %v90
    %376 = vmatpush.msra.mxu0 %v58
    %377 = vmatmul.f32.gmra.mxu0 %v179
    %v378 = vpop.f32.mrf.mxu0
    %v379 = vadd.f32 0.0, %v378
    %380 = vdwg.mxu0
    %381 = vmatpush.msra.mxu0 0.0
    %382 = vmatpush.msra.mxu0 0.0
    %383 = vmatpush.msra.mxu0 0.0
    %384 = vmatpush.msra.mxu0 0.0
    %385 = vmatpush.msra.mxu0 0.0
    %386 = vmatpush.msra.mxu0 0.0
    %387 = vmatpush.msra.mxu0 0.0
    %388 = vmatpush.msra.mxu0 0.0
    %389 = vmatpush.msra.mxu0 0.0
    %390 = vmatpush.msra.mxu0 0.0
    %391 = vmatpush.msra.mxu0 0.0
    %392 = vmatpush.msra.mxu0 0.0
    %393 = vmatpush.msra.mxu0 %v155
    %394 = vmatpush.msra.mxu0 %v123
    %395 = vmatpush.msra.mxu0 %v91
    %396 = vmatpush.msra.mxu0 %v59
    %397 = vmatmul.f32.gmra.mxu0 %v179
    %v398 = vpop.f32.mrf.mxu0
    %v399 = vadd.f32 0.0, %v398
    %400 = vdwg.mxu0
    %401 = vmatpush.msra.mxu0 0.0
    %402 = vmatpush.msra.mxu0 0.0
    %403 = vmatpush.msra.mxu0 0.0
    %404 = vmatpush.msra.mxu0 0.0
    %405 = vmatpush.msra.mxu0 0.0
    %406 = vmatpush.msra.mxu0 0.0
    %407 = vmatpush.msra.mxu0 0.0
    %408 = vmatpush.msra.mxu0 0.0
    %409 = vmatpush.msra.mxu0 0.0
    %410 = vmatpush.msra.mxu0 0.0
    %411 = vmatpush.msra.mxu0 0.0
    %412 = vmatpush.msra.mxu0 0.0
    %413 = vmatpush.msra.mxu0 %v156
    %414 = vmatpush.msra.mxu0 %v124
    %415 = vmatpush.msra.mxu0 %v92
    %416 = vmatpush.msra.mxu0 %v60
    %417 = vmatmul.f32.gmra.mxu0 %v179
    %v418 = vpop.f32.mrf.mxu0
    %v419 = vadd.f32 0.0, %v418
    %420 = vdwg.mxu0
    %421 = vmatpush.msra.mxu0 0.0
    %422 = vmatpush.msra.mxu0 0.0
    %423 = vmatpush.msra.mxu0 0.0
    %424 = vmatpush.msra.mxu0 0.0
    %425 = vmatpush.msra.mxu0 0.0
    %426 = vmatpush.msra.mxu0 0.0
    %427 = vmatpush.msra.mxu0 0.0
    %428 = vmatpush.msra.mxu0 0.0
    %429 = vmatpush.msra.mxu0 0.0
    %430 = vmatpush.msra.mxu0 0.0
    %431 = vmatpush.msra.mxu0 0.0
    %432 = vmatpush.msra.mxu0 0.0
    %433 = vmatpush.msra.mxu0 %v157
    %434 = vmatpush.msra.mxu0 %v125
    %435 = vmatpush.msra.mxu0 %v93
    %436 = vmatpush.msra.mxu0 %v61
    %437 = vmatmul.f32.gmra.mxu0 %v179
    %v438 = vpop.f32.mrf.mxu0
    %v439 = vadd.f32 0.0, %v438
    %440 = vdwg.mxu0
    %441 = vmatpush.msra.mxu0 0.0
    %442 = vmatpush.msra.mxu0 0.0
    %443 = vmatpush.msra.mxu0 0.0
    %444 = vmatpush.msra.mxu0 0.0
    %445 = vmatpush.msra.mxu0 0.0
    %446 = vmatpush.msra.mxu0 0.0
    %447 = vmatpush.msra.mxu0 0.0
    %448 = vmatpush.msra.mxu0 0.0
    %449 = vmatpush.msra.mxu0 0.0
    %450 = vmatpush.msra.mxu0 0.0
    %451 = vmatpush.msra.mxu0 0.0
    %452 = vmatpush.msra.mxu0 0.0
    %453 = vmatpush.msra.mxu0 %v158
    %454 = vmatpush.msra.mxu0 %v126
    %455 = vmatpush.msra.mxu0 %v94
    %456 = vmatpush.msra.mxu0 %v62
    %457 = vmatmul.f32.gmra.mxu0 %v179
    %v458 = vpop.f32.mrf.mxu0
    %v459 = vadd.f32 0.0, %v458
    %460 = vdwg.mxu0
    %461 = vmatpush.msra.mxu0 0.0
    %462 = vmatpush.msra.mxu0 0.0
    %463 = vmatpush.msra.mxu0 0.0
    %464 = vmatpush.msra.mxu0 0.0
    %465 = vmatpush.msra.mxu0 0.0
    %466 = vmatpush.msra.mxu0 0.0
    %467 = vmatpush.msra.mxu0 0.0
    %468 = vmatpush.msra.mxu0 0.0
    %469 = vmatpush.msra.mxu0 0.0
    %470 = vmatpush.msra.mxu0 0.0
    %471 = vmatpush.msra.mxu0 0.0
    %472 = vmatpush.msra.mxu0 0.0
    %473 = vmatpush.msra.mxu0 %v159
    %474 = vmatpush.msra.mxu0 %v127
    %475 = vmatpush.msra.mxu0 %v95
    %476 = vmatpush.msra.mxu0 %v63
    %477 = vmatmul.f32.gmra.mxu0 %v179
    %v478 = vpop.f32.mrf.mxu0
    %v479 = vadd.f32 0.0, %v478
    %480 = vdwg.mxu0
    %481 = vmatpush.msra.mxu0 0.0
    %482 = vmatpush.msra.mxu0 0.0
    %483 = vmatpush.msra.mxu0 0.0
    %484 = vmatpush.msra.mxu0 0.0
    %485 = vmatpush.msra.mxu0 0.0
    %486 = vmatpush.msra.mxu0 0.0
    %487 = vmatpush.msra.mxu0 0.0
    %488 = vmatpush.msra.mxu0 0.0
    %489 = vmatpush.msra.mxu0 0.0
    %490 = vmatpush.msra.mxu0 0.0
    %491 = vmatpush.msra.mxu0 0.0
    %492 = vmatpush.msra.mxu0 0.0
    %493 = vmatpush.msra.mxu0 %v160
    %494 = vmatpush.msra.mxu0 %v128
    %495 = vmatpush.msra.mxu0 %v96
    %496 = vmatpush.msra.mxu0 %v64
    %497 = vmatmul.f32.gmra.mxu0 %v179
    %v498 = vpop.f32.mrf.mxu0
    %v499 = vadd.f32 0.0, %v498
    %500 = vdwg.mxu0
    %501 = vmatpush.msra.mxu0 0.0
    %502 = vmatpush.msra.mxu0 0.0
    %503 = vmatpush.msra.mxu0 0.0
    %504 = vmatpush.msra.mxu0 0.0
    %505 = vmatpush.msra.mxu0 0.0
    %506 = vmatpush.msra.mxu0 0.0
    %507 = vmatpush.msra.mxu0 0.0
    %508 = vmatpush.msra.mxu0 0.0
    %509 = vmatpush.msra.mxu0 0.0
    %510 = vmatpush.msra.mxu0 0.0
    %511 = vmatpush.msra.mxu0 0.0
    %512 = vmatpush.msra.mxu0 0.0
    %513 = vmatpush.msra.mxu0 %v161
    %514 = vmatpush.msra.mxu0 %v129
    %515 = vmatpush.msra.mxu0 %v97
    %516 = vmatpush.msra.mxu0 %v65
    %517 = vmatmul.f32.gmra.mxu0 %v179
    %v518 = vpop.f32.mrf.mxu0
    %v519 = vadd.f32 0.0, %v518
    %520 = vdwg.mxu0
    %521 = vmatpush.msra.mxu0 0.0
    %522 = vmatpush.msra.mxu0 0.0
    %523 = vmatpush.msra.mxu0 0.0
    %524 = vmatpush.msra.mxu0 0.0
    %525 = vmatpush.msra.mxu0 0.0
    %526 = vmatpush.msra.mxu0 0.0
    %527 = vmatpush.msra.mxu0 0.0
    %528 = vmatpush.msra.mxu0 0.0
    %529 = vmatpush.msra.mxu0 0.0
    %530 = vmatpush.msra.mxu0 0.0
    %531 = vmatpush.msra.mxu0 0.0
    %532 = vmatpush.msra.mxu0 0.0
    %533 = vmatpush.msra.mxu0 %v162
    %534 = vmatpush.msra.mxu0 %v130
    %535 = vmatpush.msra.mxu0 %v98
    %536 = vmatpush.msra.mxu0 %v66
    %537 = vmatmul.f32.gmra.mxu0 %v179
    %v538 = vpop.f32.mrf.mxu0
    %v539 = vadd.f32 0.0, %v538
    %540 = vdwg.mxu0
    %541 = vmatpush.msra.mxu0 0.0
    %542 = vmatpush.msra.mxu0 0.0
    %543 = vmatpush.msra.mxu0 0.0
    %544 = vmatpush.msra.mxu0 0.0
    %545 = vmatpush.msra.mxu0 0.0
    %546 = vmatpush.msra.mxu0 0.0
    %547 = vmatpush.msra.mxu0 0.0
    %548 = vmatpush.msra.mxu0 0.0
    %549 = vmatpush.msra.mxu0 0.0
    %550 = vmatpush.msra.mxu0 0.0
    %551 = vmatpush.msra.mxu0 0.0
    %552 = vmatpush.msra.mxu0 0.0
    %553 = vmatpush.msra.mxu0 %v163
    %554 = vmatpush.msra.mxu0 %v131
    %555 = vmatpush.msra.mxu0 %v99
    %556 = vmatpush.msra.mxu0 %v67
    %557 = vmatmul.f32.gmra.mxu0 %v179
    %v558 = vpop.f32.mrf.mxu0
    %v559 = vadd.f32 0.0, %v558
    %560 = vdwg.mxu0
    %561 = vmatpush.msra.mxu0 0.0
    %562 = vmatpush.msra.mxu0 0.0
    %563 = vmatpush.msra.mxu0 0.0
    %564 = vmatpush.msra.mxu0 0.0
    %565 = vmatpush.msra.mxu0 0.0
    %566 = vmatpush.msra.mxu0 0.0
    %567 = vmatpush.msra.mxu0 0.0
    %568 = vmatpush.msra.mxu0 0.0
    %569 = vmatpush.msra.mxu0 0.0
    %570 = vmatpush.msra.mxu0 0.0
    %571 = vmatpush.msra.mxu0 0.0
    %572 = vmatpush.msra.mxu0 0.0
    %573 = vmatpush.msra.mxu0 %v164
    %574 = vmatpush.msra.mxu0 %v132
    %575 = vmatpush.msra.mxu0 %v100
    %576 = vmatpush.msra.mxu0 %v68
    %577 = vmatmul.f32.gmra.mxu0 %v179
    %v578 = vpop.f32.mrf.mxu0
    %v579 = vadd.f32 0.0, %v578
    %580 = vdwg.mxu0
    %581 = vmatpush.msra.mxu0 0.0
    %582 = vmatpush.msra.mxu0 0.0
    %583 = vmatpush.msra.mxu0 0.0
    %584 = vmatpush.msra.mxu0 0.0
    %585 = vmatpush.msra.mxu0 0.0
    %586 = vmatpush.msra.mxu0 0.0
    %587 = vmatpush.msra.mxu0 0.0
    %588 = vmatpush.msra.mxu0 0.0
    %589 = vmatpush.msra.mxu0 0.0
    %590 = vmatpush.msra.mxu0 0.0
    %591 = vmatpush.msra.mxu0 0.0
    %592 = vmatpush.msra.mxu0 0.0
    %593 = vmatpush.msra.mxu0 %v165
    %594 = vmatpush.msra.mxu0 %v133
    %595 = vmatpush.msra.mxu0 %v101
    %596 = vmatpush.msra.mxu0 %v69
    %597 = vmatmul.f32.gmra.mxu0 %v179
    %v598 = vpop.f32.mrf.mxu0
    %v599 = vadd.f32 0.0, %v598
    %600 = vdwg.mxu0
    %601 = vmatpush.msra.mxu0 0.0
    %602 = vmatpush.msra.mxu0 0.0
    %603 = vmatpush.msra.mxu0 0.0
    %604 = vmatpush.msra.mxu0 0.0
    %605 = vmatpush.msra.mxu0 0.0
    %606 = vmatpush.msra.mxu0 0.0
    %607 = vmatpush.msra.mxu0 0.0
    %608 = vmatpush.msra.mxu0 0.0
    %609 = vmatpush.msra.mxu0 0.0
    %610 = vmatpush.msra.mxu0 0.0
    %611 = vmatpush.msra.mxu0 0.0
    %612 = vmatpush.msra.mxu0 0.0
    %613 = vmatpush.msra.mxu0 %v166
    %614 = vmatpush.msra.mxu0 %v134
    %615 = vmatpush.msra.mxu0 %v102
    %616 = vmatpush.msra.mxu0 %v70
    %617 = vmatmul.f32.gmra.mxu0 %v179
    %v618 = vpop.f32.mrf.mxu0
    %v619 = vadd.f32 0.0, %v618
    %620 = vdwg.mxu0
    %621 = vmatpush.msra.mxu0 0.0
    %622 = vmatpush.msra.mxu0 0.0
    %623 = vmatpush.msra.mxu0 0.0
    %624 = vmatpush.msra.mxu0 0.0
    %625 = vmatpush.msra.mxu0 0.0
    %626 = vmatpush.msra.mxu0 0.0
    %627 = vmatpush.msra.mxu0 0.0
    %628 = vmatpush.msra.mxu0 0.0
    %629 = vmatpush.msra.mxu0 0.0
    %630 = vmatpush.msra.mxu0 0.0
    %631 = vmatpush.msra.mxu0 0.0
    %632 = vmatpush.msra.mxu0 0.0
    %633 = vmatpush.msra.mxu0 %v167
    %634 = vmatpush.msra.mxu0 %v135
    %635 = vmatpush.msra.mxu0 %v103
    %636 = vmatpush.msra.mxu0 %v71
    %637 = vmatmul.f32.gmra.mxu0 %v179
    %v638 = vpop.f32.mrf.mxu0
    %v639 = vadd.f32 0.0, %v638
    %640 = vdwg.mxu0
    %641 = vmatpush.msra.mxu0 0.0
    %642 = vmatpush.msra.mxu0 0.0
    %643 = vmatpush.msra.mxu0 0.0
    %644 = vmatpush.msra.mxu0 0.0
    %645 = vmatpush.msra.mxu0 0.0
    %646 = vmatpush.msra.mxu0 0.0
    %647 = vmatpush.msra.mxu0 0.0
    %648 = vmatpush.msra.mxu0 0.0
    %649 = vmatpush.msra.mxu0 0.0
    %650 = vmatpush.msra.mxu0 0.0
    %651 = vmatpush.msra.mxu0 0.0
    %652 = vmatpush.msra.mxu0 0.0
    %653 = vmatpush.msra.mxu0 %v168
    %654 = vmatpush.msra.mxu0 %v136
    %655 = vmatpush.msra.mxu0 %v104
    %656 = vmatpush.msra.mxu0 %v72
    %657 = vmatmul.f32.gmra.mxu0 %v179
    %v658 = vpop.f32.mrf.mxu0
    %v659 = vadd.f32 0.0, %v658
    %660 = vdwg.mxu0
    %661 = vmatpush.msra.mxu0 0.0
    %662 = vmatpush.msra.mxu0 0.0
    %663 = vmatpush.msra.mxu0 0.0
    %664 = vmatpush.msra.mxu0 0.0
    %665 = vmatpush.msra.mxu0 0.0
    %666 = vmatpush.msra.mxu0 0.0
    %667 = vmatpush.msra.mxu0 0.0
    %668 = vmatpush.msra.mxu0 0.0
    %669 = vmatpush.msra.mxu0 0.0
    %670 = vmatpush.msra.mxu0 0.0
    %671 = vmatpush.msra.mxu0 0.0
    %672 = vmatpush.msra.mxu0 0.0
    %673 = vmatpush.msra.mxu0 %v169
    %674 = vmatpush.msra.mxu0 %v137
    %675 = vmatpush.msra.mxu0 %v105
    %676 = vmatpush.msra.mxu0 %v73
    %677 = vmatmul.f32.gmra.mxu0 %v179
    %v678 = vpop.f32.mrf.mxu0
    %v679 = vadd.f32 0.0, %v678
    %680 = vdwg.mxu0
    %681 = vmatpush.msra.mxu0 0.0
    %682 = vmatpush.msra.mxu0 0.0
    %683 = vmatpush.msra.mxu0 0.0
    %684 = vmatpush.msra.mxu0 0.0
    %685 = vmatpush.msra.mxu0 0.0
    %686 = vmatpush.msra.mxu0 0.0
    %687 = vmatpush.msra.mxu0 0.0
    %688 = vmatpush.msra.mxu0 0.0
    %689 = vmatpush.msra.mxu0 0.0
    %690 = vmatpush.msra.mxu0 0.0
    %691 = vmatpush.msra.mxu0 0.0
    %692 = vmatpush.msra.mxu0 0.0
    %693 = vmatpush.msra.mxu0 %v170
    %694 = vmatpush.msra.mxu0 %v138
    %695 = vmatpush.msra.mxu0 %v106
    %696 = vmatpush.msra.mxu0 %v74
    %697 = vmatmul.f32.gmra.mxu0 %v179
    %v698 = vpop.f32.mrf.mxu0
    %v699 = vadd.f32 0.0, %v698
    %700 = vdwg.mxu0
    %701 = vmatpush.msra.mxu0 0.0
    %702 = vmatpush.msra.mxu0 0.0
    %703 = vmatpush.msra.mxu0 0.0
    %704 = vmatpush.msra.mxu0 0.0
    %705 = vmatpush.msra.mxu0 0.0
    %706 = vmatpush.msra.mxu0 0.0
    %707 = vmatpush.msra.mxu0 0.0
    %708 = vmatpush.msra.mxu0 0.0
    %709 = vmatpush.msra.mxu0 0.0
    %710 = vmatpush.msra.mxu0 0.0
    %711 = vmatpush.msra.mxu0 0.0
    %712 = vmatpush.msra.mxu0 0.0
    %713 = vmatpush.msra.mxu0 %v171
    %714 = vmatpush.msra.mxu0 %v139
    %715 = vmatpush.msra.mxu0 %v107
    %716 = vmatpush.msra.mxu0 %v75
    %717 = vmatmul.f32.gmra.mxu0 %v179
    %v718 = vpop.f32.mrf.mxu0
    %v719 = vadd.f32 0.0, %v718
    %720 = vdwg.mxu0
    %721 = vmatpush.msra.mxu0 0.0
    %722 = vmatpush.msra.mxu0 0.0
    %723 = vmatpush.msra.mxu0 0.0
    %724 = vmatpush.msra.mxu0 0.0
    %725 = vmatpush.msra.mxu0 0.0
    %726 = vmatpush.msra.mxu0 0.0
    %727 = vmatpush.msra.mxu0 0.0
    %728 = vmatpush.msra.mxu0 0.0
    %729 = vmatpush.msra.mxu0 0.0
    %730 = vmatpush.msra.mxu0 0.0
    %731 = vmatpush.msra.mxu0 0.0
    %732 = vmatpush.msra.mxu0 0.0
    %733 = vmatpush.msra.mxu0 %v172
    %734 = vmatpush.msra.mxu0 %v140
    %735 = vmatpush.msra.mxu0 %v108
    %736 = vmatpush.msra.mxu0 %v76
    %737 = vmatmul.f32.gmra.mxu0 %v179
    %v738 = vpop.f32.mrf.mxu0
    %v739 = vadd.f32 0.0, %v738
    %740 = vdwg.mxu0
    %741 = vmatpush.msra.mxu0 0.0
    %742 = vmatpush.msra.mxu0 0.0
    %743 = vmatpush.msra.mxu0 0.0
    %744 = vmatpush.msra.mxu0 0.0
    %745 = vmatpush.msra.mxu0 0.0
    %746 = vmatpush.msra.mxu0 0.0
    %747 = vmatpush.msra.mxu0 0.0
    %748 = vmatpush.msra.mxu0 0.0
    %749 = vmatpush.msra.mxu0 0.0
    %750 = vmatpush.msra.mxu0 0.0
    %751 = vmatpush.msra.mxu0 0.0
    %752 = vmatpush.msra.mxu0 0.0
    %753 = vmatpush.msra.mxu0 %v173
    %754 = vmatpush.msra.mxu0 %v141
    %755 = vmatpush.msra.mxu0 %v109
    %756 = vmatpush.msra.mxu0 %v77
    %757 = vmatmul.f32.gmra.mxu0 %v179
    %v758 = vpop.f32.mrf.mxu0
    %v759 = vadd.f32 0.0, %v758
    %760 = vdwg.mxu0
    %761 = vmatpush.msra.mxu0 0.0
    %762 = vmatpush.msra.mxu0 0.0
    %763 = vmatpush.msra.mxu0 0.0
    %764 = vmatpush.msra.mxu0 0.0
    %765 = vmatpush.msra.mxu0 0.0
    %766 = vmatpush.msra.mxu0 0.0
    %767 = vmatpush.msra.mxu0 0.0
    %768 = vmatpush.msra.mxu0 0.0
    %769 = vmatpush.msra.mxu0 0.0
    %770 = vmatpush.msra.mxu0 0.0
    %771 = vmatpush.msra.mxu0 0.0
    %772 = vmatpush.msra.mxu0 0.0
    %773 = vmatpush.msra.mxu0 %v174
    %774 = vmatpush.msra.mxu0 %v142
    %775 = vmatpush.msra.mxu0 %v110
    %776 = vmatpush.msra.mxu0 %v78
    %777 = vmatmul.f32.gmra.mxu0 %v179
    %v778 = vpop.f32.mrf.mxu0
    %v779 = vadd.f32 0.0, %v778
    %780 = vdwg.mxu0
    %781 = vmatpush.msra.mxu0 0.0
    %782 = vmatpush.msra.mxu0 0.0
    %783 = vmatpush.msra.mxu0 0.0
    %784 = vmatpush.msra.mxu0 0.0
    %785 = vmatpush.msra.mxu0 0.0
    %786 = vmatpush.msra.mxu0 0.0
    %787 = vmatpush.msra.mxu0 0.0
    %788 = vmatpush.msra.mxu0 0.0
    %789 = vmatpush.msra.mxu0 0.0
    %790 = vmatpush.msra.mxu0 0.0
    %791 = vmatpush.msra.mxu0 0.0
    %792 = vmatpush.msra.mxu0 0.0
    %793 = vmatpush.msra.mxu0 %v175
    %794 = vmatpush.msra.mxu0 %v143
    %795 = vmatpush.msra.mxu0 %v111
    %796 = vmatpush.msra.mxu0 %v79
    %797 = vmatmul.f32.gmra.mxu0 %v179
    %v798 = vpop.f32.mrf.mxu0
    %v799 = vadd.f32 0.0, %v798
    %800 = vdwg.mxu0
    %801 = vmatpush.msra.mxu0 0.0
    %802 = vmatpush.msra.mxu0 0.0
    %803 = vmatpush.msra.mxu0 0.0
    %804 = vmatpush.msra.mxu0 0.0
    %805 = vmatpush.msra.mxu0 0.0
    %806 = vmatpush.msra.mxu0 0.0
    %807 = vmatpush.msra.mxu0 0.0
    %808 = vmatpush.msra.mxu0 0.0
    %809 = vmatpush.msra.mxu0 0.0
    %810 = vmatpush.msra.mxu0 0.0
    %811 = vmatpush.msra.mxu0 0.0
    %812 = vmatpush.msra.mxu0 0.0
    %813 = vmatpush.msra.mxu0 %v176
    %814 = vmatpush.msra.mxu0 %v144
    %815 = vmatpush.msra.mxu0 %v112
    %816 = vmatpush.msra.mxu0 %v80
    %817 = vmatmul.f32.gmra.mxu0 %v179
    %v818 = vpop.f32.mrf.mxu0
    %v819 = vadd.f32 0.0, %v818
    %820 = vdwg.mxu0
    %821 = vst [vmem:[#allocation2] sm:$0xff] %v199
    %822 = vst [vmem:[#allocation2 + $0x8] sm:$0xff] %v219
    %823 = vst [vmem:[#allocation2 + $0x10] sm:$0xff] %v239
    %824 = vst [vmem:[#allocation2 + $0x18] sm:$0xff] %v259
    %825 = vst [vmem:[#allocation2 + $0x20] sm:$0xff] %v279
    %826 = vst [vmem:[#allocation2 + $0x28] sm:$0xff] %v299
    %827 = vst [vmem:[#allocation2 + $0x30] sm:$0xff] %v319
    %828 = vst [vmem:[#allocation2 + $0x38] sm:$0xff] %v339
    %829 = vst [vmem:[#allocation2 + $0x40] sm:$0xff] %v359
    %830 = vst [vmem:[#allocation2 + $0x48] sm:$0xff] %v379
    %831 = vst [vmem:[#allocation2 + $0x50] sm:$0xff] %v399
    %832 = vst [vmem:[#allocation2 + $0x58] sm:$0xff] %v419
    %833 = vst [vmem:[#allocation2 + $0x60] sm:$0xff] %v439
    %834 = vst [vmem:[#allocation2 + $0x68] sm:$0xff] %v459
    %835 = vst [vmem:[#allocation2 + $0x70] sm:$0xff] %v479
    %836 = vst [vmem:[#allocation2 + $0x78] sm:$0xff] %v499
    %837 = vst [vmem:[#allocation2 + $0x80] sm:$0xff] %v519
    %838 = vst [vmem:[#allocation2 + $0x88] sm:$0xff] %v539
    %839 = vst [vmem:[#allocation2 + $0x90] sm:$0xff] %v559
    %840 = vst [vmem:[#allocation2 + $0x98] sm:$0xff] %v579
    %841 = vst [vmem:[#allocation2 + $0xa0] sm:$0xff] %v599
    %842 = vst [vmem:[#allocation2 + $0xa8] sm:$0xff] %v619
    %843 = vst [vmem:[#allocation2 + $0xb0] sm:$0xff] %v639
    %844 = vst [vmem:[#allocation2 + $0xb8] sm:$0xff] %v659
    %845 = vst [vmem:[#allocation2 + $0xc0] sm:$0xff] %v679
    %846 = vst [vmem:[#allocation2 + $0xc8] sm:$0xff] %v699
    %847 = vst [vmem:[#allocation2 + $0xd0] sm:$0xff] %v719
    %848 = vst [vmem:[#allocation2 + $0xd8] sm:$0xff] %v739
    %849 = vst [vmem:[#allocation2 + $0xe0] sm:$0xff] %v759
    %850 = vst [vmem:[#allocation2 + $0xe8] sm:$0xff] %v779
    %851 = vst [vmem:[#allocation2 + $0xf0] sm:$0xff] %v799
    %852 = vst [vmem:[#allocation2 + $0xf8] sm:$0xff] %v819
    %v853 = vld [vmem:[#allocation6] sm:$0xff]
    %v854 = vld [vmem:[#allocation6 + $0x8] sm:$0xff]
    %v855 = vld [vmem:[#allocation6 + $0x10] sm:$0xff]
    %v856 = vld [vmem:[#allocation6 + $0x18] sm:$0xff]
    %v857 = vperm.slane %v853, 0
    %v858 = vperm.slane %v854, 0
    %v859 = vperm.slane %v855, 0
    %v860 = vperm.slane %v856, 0
    %v861 = vperm.slane %v853, 1
    %v862 = vperm.slane %v854, 1
    %v863 = vperm.slane %v855, 1
    %v864 = vperm.slane %v856, 1
    %v865 = vperm.slane %v853, 2
    %v866 = vperm.slane %v854, 2
    %v867 = vperm.slane %v855, 2
    %v868 = vperm.slane %v856, 2
    %v869 = vperm.slane %v853, 3
    %v870 = vperm.slane %v854, 3
    %v871 = vperm.slane %v855, 3
    %v872 = vperm.slane %v856, 3
    %v873 = vperm.slane %v853, 4
    %v874 = vperm.slane %v854, 4
    %v875 = vperm.slane %v855, 4
    %v876 = vperm.slane %v856, 4
    %v877 = vperm.slane %v853, 5
    %v878 = vperm.slane %v854, 5
    %v879 = vperm.slane %v855, 5
    %v880 = vperm.slane %v856, 5
    %v881 = vld [vmem:[%s2] sm:$0xff]
    %883 = vset.pattern.permute.xlu0 0
    %884 = vperm.xlu0 %883, %v881
    %v885 = vpop.permute.xlu0 %884
    %v887 = vld [vmem:[#allocation2] sm:$0xff]
    %v888 = vld [vmem:[#allocation2 + $0x8] sm:$0xff]
    %v889 = vld [vmem:[#allocation2 + $0x10] sm:$0xff]
    %v890 = vld [vmem:[#allocation2 + $0x18] sm:$0xff]
    %v891 = vadd.f32 %v887, %v885
    %v892 = vadd.f32 %v888, %v885
    %v893 = vadd.f32 %v889, %v885
    %v894 = vadd.f32 %v890, %v885
    %v895 = vsub.f32 %v891, -0.0
    %v896 = vsub.f32 %v892, -0.0
    %v897 = vsub.f32 %v893, -0.0
    %v898 = vsub.f32 %v894, -0.0
    %v899 = vsub.f32 %v895, -3.1800003
    %v900 = vsub.f32 %v896, -3.1800003
    %v901 = vsub.f32 %v897, -3.1800003
    %v902 = vsub.f32 %v898, -3.1800003
    %v903 = vmul.f32 %v899, 0.1
    %v904 = vmul.f32 %v900, 0.1
    %v905 = vmul.f32 %v901, 0.1
    %v906 = vmul.f32 %v902, 0.1
    %v907 = vadd.f32 %v903, 0.0
    %v908 = vadd.f32 %v904, 0.0
    %v909 = vadd.f32 %v905, 0.0
    %v910 = vadd.f32 %v906, 0.0
    %v911 = vmul.f32 %v857, 0.0
    %v912 = vmul.f32 %v858, 0.0
    %v913 = vmul.f32 %v859, 0.0
    %v914 = vmul.f32 %v860, 0.0
    %v915 = vadd.f32 %v911, %v861
    %v916 = vadd.f32 %v912, %v862
    %v917 = vadd.f32 %v913, %v863
    %v918 = vadd.f32 %v914, %v864
    %v919 = vmul.f32 %v865, 0.0
    %v920 = vmul.f32 %v866, 0.0
    %v921 = vmul.f32 %v867, 0.0
    %v922 = vmul.f32 %v868, 0.0
    %v923 = vadd.f32 %v919, %v869
    %v924 = vadd.f32 %v920, %v870
    %v925 = vadd.f32 %v921, %v871
    %v926 = vadd.f32 %v922, %v872
    %v927 = vmul.f32 %v873, 0.0
    %v928 = vmul.f32 %v874, 0.0
    %v929 = vmul.f32 %v875, 0.0
    %v930 = vmul.f32 %v876, 0.0
    %v931 = vadd.f32 %v927, %v877
    %v932 = vadd.f32 %v928, %v878
    %v933 = vadd.f32 %v929, %v879
    %v934 = vadd.f32 %v930, %v880
    %v935 = vsub.f32 %v907, 2.3
    %v936 = vsub.f32 %v908, 2.3
    %v937 = vsub.f32 %v909, 2.3
    %v938 = vsub.f32 %v910, 2.3
    %vm939 = vcmp.gt.f32.partialorder %v935, 0.0
    %vm940 = vcmp.gt.f32.partialorder %v936, 0.0
    %vm941 = vcmp.gt.f32.partialorder %v937, 0.0
    %vm942 = vcmp.gt.f32.partialorder %v938, 0.0
    %v943 = vsel %vm939, 1, 0
    %v944 = vsel %vm940, 1, 0
    %v945 = vsel %vm941, 1, 0
    %v946 = vsel %vm942, 1, 0
    %v947 = vcvt.s32.f32 %v943
    %v948 = vcvt.s32.f32 %v944
    %v949 = vcvt.s32.f32 %v945
    %v950 = vcvt.s32.f32 %v946
    %v951 = vpack.c.bf16 %v948, %v947
    %v952 = vpack.c.bf16 %v950, %v949
    %953 = vst [vmem:[#allocation8] sm:$0xff] %v951
    %s954 = scalar_lea.vmem [#allocation8], 8
    %955 = vst [vmem:[%s954] sm:$0xff] %v952
    %s956 = scalar_lea.vmem [#allocation2], 32
    %v957 = vld [vmem:[%s956] sm:$0xff]
    %v958 = vld [vmem:[%s956 + $0x8] sm:$0xff]
    %v959 = vld [vmem:[%s956 + $0x10] sm:$0xff]
    %v960 = vld [vmem:[%s956 + $0x18] sm:$0xff]
    %v961 = vadd.f32 %v957, %v885
    %v962 = vadd.f32 %v958, %v885
    %v963 = vadd.f32 %v959, %v885
    %v964 = vadd.f32 %v960, %v885
    %v965 = vmul.f32 %v923, %v923
    %v966 = vmul.f32 %v924, %v924
    %v967 = vmul.f32 %v925, %v925
    %v968 = vmul.f32 %v926, %v926
    %v969 = vmul.f32 %v965, %v923
    %v970 = vmul.f32 %v966, %v924
    %v971 = vmul.f32 %v967, %v925
    %v972 = vmul.f32 %v968, %v926
    %v973 = vmul.f32 %v915, %v915
    %v974 = vmul.f32 %v916, %v916
    %v975 = vmul.f32 %v917, %v917
    %v976 = vmul.f32 %v918, %v918
    %v977 = vmul.f32 %v931, %v969
    %v978 = vmul.f32 %v932, %v970
    %v979 = vmul.f32 %v933, %v971
    %v980 = vmul.f32 %v934, %v972
    %v981 = vmul.f32 %v977, 120.0
    %v982 = vmul.f32 %v978, 120.0
    %v983 = vmul.f32 %v979, 120.0
    %v984 = vmul.f32 %v980, 120.0
    %v985 = vsub.f32 %v907, 115.0
    %v986 = vsub.f32 %v908, 115.0
    %v987 = vsub.f32 %v909, 115.0
    %v988 = vsub.f32 %v910, 115.0
    %v989 = vmul.f32 %v981, %v985
    %v990 = vmul.f32 %v982, %v986
    %v991 = vmul.f32 %v983, %v987
    %v992 = vmul.f32 %v984, %v988
    %v993 = vmul.f32 %v973, %v973
    %v994 = vmul.f32 %v974, %v974
    %v995 = vmul.f32 %v975, %v975
    %v996 = vmul.f32 %v976, %v976
    %v997 = vmul.f32 %v993, 36.0
    %v998 = vmul.f32 %v994, 36.0
    %v999 = vmul.f32 %v995, 36.0
    %v1000 = vmul.f32 %v996, 36.0
    %v1001 = vsub.f32 %v907, -12.0
    %v1002 = vsub.f32 %v908, -12.0
    %v1003 = vsub.f32 %v909, -12.0
    %v1004 = vsub.f32 %v910, -12.0
    %v1005 = vmul.f32 %v997, %v1001
    %v1006 = vmul.f32 %v998, %v1002
    %v1007 = vmul.f32 %v999, %v1003
    %v1008 = vmul.f32 %v1000, %v1004
    %v1009 = vsub.f32 %v907, 10.6
    %v1010 = vsub.f32 %v908, 10.6
    %v1011 = vsub.f32 %v909, 10.6
    %v1012 = vsub.f32 %v910, 10.6
    %v1013 = vmul.f32 %v1009, 0.3
    %v1014 = vmul.f32 %v1010, 0.3
    %v1015 = vmul.f32 %v1011, 0.3
    %v1016 = vmul.f32 %v1012, 0.3
    %v1017 = vsub.f32 %v961, %v989
    %v1018 = vsub.f32 %v962, %v990
    %v1019 = vsub.f32 %v963, %v991
    %v1020 = vsub.f32 %v964, %v992
    %v1021 = vsub.f32 %v1017, %v1005
    %v1022 = vsub.f32 %v1018, %v1006
    %v1023 = vsub.f32 %v1019, %v1007
    %v1024 = vsub.f32 %v1020, %v1008
    %v1025 = vsub.f32 %v1021, %v1013
    %v1026 = vsub.f32 %v1022, %v1014
    %v1027 = vsub.f32 %v1023, %v1015
    %v1028 = vsub.f32 %v1024, %v1016
    %v1029 = vmul.f32 %v1025, 0.1
    %v1030 = vmul.f32 %v1026, 0.1
    %v1031 = vmul.f32 %v1027, 0.1
    %v1032 = vmul.f32 %v1028, 0.1
    %v1033 = vadd.f32 %v907, %v1029
    %v1034 = vadd.f32 %v908, %v1030
    %v1035 = vadd.f32 %v909, %v1031
    %v1036 = vadd.f32 %v910, %v1032
    %v1037 = vmul.f32 %v915, %v857
    %v1038 = vmul.f32 %v916, %v858
    %v1039 = vmul.f32 %v917, %v859
    %v1040 = vmul.f32 %v918, %v860
    %v1041 = vadd.f32 %v1037, %v861
    %v1042 = vadd.f32 %v1038, %v862
    %v1043 = vadd.f32 %v1039, %v863
    %v1044 = vadd.f32 %v1040, %v864
    %v1045 = vmul.f32 %v923, %v865
    %v1046 = vmul.f32 %v924, %v866
    %v1047 = vmul.f32 %v925, %v867
    %v1048 = vmul.f32 %v926, %v868
    %v1049 = vadd.f32 %v1045, %v869
    %v1050 = vadd.f32 %v1046, %v870
    %v1051 = vadd.f32 %v1047, %v871
    %v1052 = vadd.f32 %v1048, %v872
    %v1053 = vmul.f32 %v931, %v873
    %v1054 = vmul.f32 %v932, %v874
    %v1055 = vmul.f32 %v933, %v875
    %v1056 = vmul.f32 %v934, %v876
    %v1057 = vadd.f32 %v1053, %v877
    %v1058 = vadd.f32 %v1054, %v878
    %v1059 = vadd.f32 %v1055, %v879
    %v1060 = vadd.f32 %v1056, %v880
    %v1061 = vsub.f32 %v1033, 2.3
    %v1062 = vsub.f32 %v1034, 2.3
    %v1063 = vsub.f32 %v1035, 2.3
    %v1064 = vsub.f32 %v1036, 2.3
    %vm1065 = vcmp.gt.f32.partialorder %v1061, 0.0
    %vm1066 = vcmp.gt.f32.partialorder %v1062, 0.0
    %vm1067 = vcmp.gt.f32.partialorder %v1063, 0.0
    %vm1068 = vcmp.gt.f32.partialorder %v1064, 0.0
    %v1069 = vsel %vm1065, 1, 0
    %v1070 = vsel %vm1066, 1, 0
    %v1071 = vsel %vm1067, 1, 0
    %v1072 = vsel %vm1068, 1, 0
    %v1073 = vcvt.s32.f32 %v1069
    %v1074 = vcvt.s32.f32 %v1070
    %v1075 = vcvt.s32.f32 %v1071
    %v1076 = vcvt.s32.f32 %v1072
    %v1077 = vpack.c.bf16 %v1074, %v1073
    %v1078 = vpack.c.bf16 %v1076, %v1075
    %s1079 = scalar_lea.vmem [#allocation8], 16
    %1080 = vst [vmem:[%s1079] sm:$0xff] %v1077
    %s1081 = scalar_lea.vmem [#allocation8], 24
    %1082 = vst [vmem:[%s1081] sm:$0xff] %v1078
    %s1083 = scalar_lea.vmem [#allocation2], 64
    %v1084 = vld [vmem:[%s1083] sm:$0xff]
    %v1085 = vld [vmem:[%s1083 + $0x8] sm:$0xff]
    %v1086 = vld [vmem:[%s1083 + $0x10] sm:$0xff]
    %v1087 = vld [vmem:[%s1083 + $0x18] sm:$0xff]
    %v1088 = vadd.f32 %v1084, %v885
    %v1089 = vadd.f32 %v1085, %v885
    %v1090 = vadd.f32 %v1086, %v885
    %v1091 = vadd.f32 %v1087, %v885
    %v1092 = vmul.f32 %v1049, %v1049
    %v1093 = vmul.f32 %v1050, %v1050
    %v1094 = vmul.f32 %v1051, %v1051
    %v1095 = vmul.f32 %v1052, %v1052
    %v1096 = vmul.f32 %v1092, %v1049
    %v1097 = vmul.f32 %v1093, %v1050
    %v1098 = vmul.f32 %v1094, %v1051
    %v1099 = vmul.f32 %v1095, %v1052
    %v1100 = vmul.f32 %v1041, %v1041
    %v1101 = vmul.f32 %v1042, %v1042
    %v1102 = vmul.f32 %v1043, %v1043
    %v1103 = vmul.f32 %v1044, %v1044
    %v1104 = vmul.f32 %v1057, %v1096
    %v1105 = vmul.f32 %v1058, %v1097
    %v1106 = vmul.f32 %v1059, %v1098
    %v1107 = vmul.f32 %v1060, %v1099
    %v1108 = vmul.f32 %v1104, 120.0
    %v1109 = vmul.f32 %v1105, 120.0
    %v1110 = vmul.f32 %v1106, 120.0
    %v1111 = vmul.f32 %v1107, 120.0
    %v1112 = vsub.f32 %v1033, 115.0
    %v1113 = vsub.f32 %v1034, 115.0
    %v1114 = vsub.f32 %v1035, 115.0
    %v1115 = vsub.f32 %v1036, 115.0
    %v1116 = vmul.f32 %v1108, %v1112
    %v1117 = vmul.f32 %v1109, %v1113
    %v1118 = vmul.f32 %v1110, %v1114
    %v1119 = vmul.f32 %v1111, %v1115
    %v1120 = vmul.f32 %v1100, %v1100
    %v1121 = vmul.f32 %v1101, %v1101
    %v1122 = vmul.f32 %v1102, %v1102
    %v1123 = vmul.f32 %v1103, %v1103
    %v1124 = vmul.f32 %v1120, 36.0
    %v1125 = vmul.f32 %v1121, 36.0
    %v1126 = vmul.f32 %v1122, 36.0
    %v1127 = vmul.f32 %v1123, 36.0
    %v1128 = vsub.f32 %v1033, -12.0
    %v1129 = vsub.f32 %v1034, -12.0
    %v1130 = vsub.f32 %v1035, -12.0
    %v1131 = vsub.f32 %v1036, -12.0
    %v1132 = vmul.f32 %v1124, %v1128
    %v1133 = vmul.f32 %v1125, %v1129
    %v1134 = vmul.f32 %v1126, %v1130
    %v1135 = vmul.f32 %v1127, %v1131
    %v1136 = vsub.f32 %v1033, 10.6
    %v1137 = vsub.f32 %v1034, 10.6
    %v1138 = vsub.f32 %v1035, 10.6
    %v1139 = vsub.f32 %v1036, 10.6
    %v1140 = vmul.f32 %v1136, 0.3
    %v1141 = vmul.f32 %v1137, 0.3
    %v1142 = vmul.f32 %v1138, 0.3
    %v1143 = vmul.f32 %v1139, 0.3
    %v1144 = vsub.f32 %v1088, %v1116
    %v1145 = vsub.f32 %v1089, %v1117
    %v1146 = vsub.f32 %v1090, %v1118
    %v1147 = vsub.f32 %v1091, %v1119
    %v1148 = vsub.f32 %v1144, %v1132
    %v1149 = vsub.f32 %v1145, %v1133
    %v1150 = vsub.f32 %v1146, %v1134
    %v1151 = vsub.f32 %v1147, %v1135
    %v1152 = vsub.f32 %v1148, %v1140
    %v1153 = vsub.f32 %v1149, %v1141
    %v1154 = vsub.f32 %v1150, %v1142
    %v1155 = vsub.f32 %v1151, %v1143
    %v1156 = vmul.f32 %v1152, 0.1
    %v1157 = vmul.f32 %v1153, 0.1
    %v1158 = vmul.f32 %v1154, 0.1
    %v1159 = vmul.f32 %v1155, 0.1
    %v1160 = vadd.f32 %v1033, %v1156
    %v1161 = vadd.f32 %v1034, %v1157
    %v1162 = vadd.f32 %v1035, %v1158
    %v1163 = vadd.f32 %v1036, %v1159
    %v1164 = vmul.f32 %v1041, %v857
    %v1165 = vmul.f32 %v1042, %v858
    %v1166 = vmul.f32 %v1043, %v859
    %v1167 = vmul.f32 %v1044, %v860
    %v1168 = vadd.f32 %v1164, %v861
    %v1169 = vadd.f32 %v1165, %v862
    %v1170 = vadd.f32 %v1166, %v863
    %v1171 = vadd.f32 %v1167, %v864
    %v1172 = vmul.f32 %v1049, %v865
    %v1173 = vmul.f32 %v1050, %v866
    %v1174 = vmul.f32 %v1051, %v867
    %v1175 = vmul.f32 %v1052, %v868
    %v1176 = vadd.f32 %v1172, %v869
    %v1177 = vadd.f32 %v1173, %v870
    %v1178 = vadd.f32 %v1174, %v871
    %v1179 = vadd.f32 %v1175, %v872
    %v1180 = vmul.f32 %v1057, %v873
    %v1181 = vmul.f32 %v1058, %v874
    %v1182 = vmul.f32 %v1059, %v875
    %v1183 = vmul.f32 %v1060, %v876
    %v1184 = vadd.f32 %v1180, %v877
    %v1185 = vadd.f32 %v1181, %v878
    %v1186 = vadd.f32 %v1182, %v879
    %v1187 = vadd.f32 %v1183, %v880
    %v1188 = vsub.f32 %v1160, 2.3
    %v1189 = vsub.f32 %v1161, 2.3
    %v1190 = vsub.f32 %v1162, 2.3
    %v1191 = vsub.f32 %v1163, 2.3
    %vm1192 = vcmp.gt.f32.partialorder %v1188, 0.0
    %vm1193 = vcmp.gt.f32.partialorder %v1189, 0.0
    %vm1194 = vcmp.gt.f32.partialorder %v1190, 0.0
    %vm1195 = vcmp.gt.f32.partialorder %v1191, 0.0
    %v1196 = vsel %vm1192, 1, 0
    %v1197 = vsel %vm1193, 1, 0
    %v1198 = vsel %vm1194, 1, 0
    %v1199 = vsel %vm1195, 1, 0
    %v1200 = vcvt.s32.f32 %v1196
    %v1201 = vcvt.s32.f32 %v1197
    %v1202 = vcvt.s32.f32 %v1198
    %v1203 = vcvt.s32.f32 %v1199
    %v1204 = vpack.c.bf16 %v1201, %v1200
    %v1205 = vpack.c.bf16 %v1203, %v1202
    %s1206 = scalar_lea.vmem [#allocation8], 32
    %1207 = vst [vmem:[%s1206] sm:$0xff] %v1204
    %s1208 = scalar_lea.vmem [#allocation8], 40
    %1209 = vst [vmem:[%s1208] sm:$0xff] %v1205
    %s1210 = scalar_lea.vmem [#allocation2], 96
    %v1211 = vld [vmem:[%s1210] sm:$0xff]
    %v1212 = vld [vmem:[%s1210 + $0x8] sm:$0xff]
    %v1213 = vld [vmem:[%s1210 + $0x10] sm:$0xff]
    %v1214 = vld [vmem:[%s1210 + $0x18] sm:$0xff]
    %v1215 = vadd.f32 %v1211, %v885
    %v1216 = vadd.f32 %v1212, %v885
    %v1217 = vadd.f32 %v1213, %v885
    %v1218 = vadd.f32 %v1214, %v885
    %v1219 = vmul.f32 %v1176, %v1176
    %v1220 = vmul.f32 %v1177, %v1177
    %v1221 = vmul.f32 %v1178, %v1178
    %v1222 = vmul.f32 %v1179, %v1179
    %v1223 = vmul.f32 %v1219, %v1176
    %v1224 = vmul.f32 %v1220, %v1177
    %v1225 = vmul.f32 %v1221, %v1178
    %v1226 = vmul.f32 %v1222, %v1179
    %v1227 = vmul.f32 %v1168, %v1168
    %v1228 = vmul.f32 %v1169, %v1169
    %v1229 = vmul.f32 %v1170, %v1170
    %v1230 = vmul.f32 %v1171, %v1171
    %v1231 = vmul.f32 %v1184, %v1223
    %v1232 = vmul.f32 %v1185, %v1224
    %v1233 = vmul.f32 %v1186, %v1225
    %v1234 = vmul.f32 %v1187, %v1226
    %v1235 = vmul.f32 %v1231, 120.0
    %v1236 = vmul.f32 %v1232, 120.0
    %v1237 = vmul.f32 %v1233, 120.0
    %v1238 = vmul.f32 %v1234, 120.0
    %v1239 = vsub.f32 %v1160, 115.0
    %v1240 = vsub.f32 %v1161, 115.0
    %v1241 = vsub.f32 %v1162, 115.0
    %v1242 = vsub.f32 %v1163, 115.0
    %v1243 = vmul.f32 %v1235, %v1239
    %v1244 = vmul.f32 %v1236, %v1240
    %v1245 = vmul.f32 %v1237, %v1241
    %v1246 = vmul.f32 %v1238, %v1242
    %v1247 = vmul.f32 %v1227, %v1227
    %v1248 = vmul.f32 %v1228, %v1228
    %v1249 = vmul.f32 %v1229, %v1229
    %v1250 = vmul.f32 %v1230, %v1230
    %v1251 = vmul.f32 %v1247, 36.0
    %v1252 = vmul.f32 %v1248, 36.0
    %v1253 = vmul.f32 %v1249, 36.0
    %v1254 = vmul.f32 %v1250, 36.0
    %v1255 = vsub.f32 %v1160, -12.0
    %v1256 = vsub.f32 %v1161, -12.0
    %v1257 = vsub.f32 %v1162, -12.0
    %v1258 = vsub.f32 %v1163, -12.0
    %v1259 = vmul.f32 %v1251, %v1255
    %v1260 = vmul.f32 %v1252, %v1256
    %v1261 = vmul.f32 %v1253, %v1257
    %v1262 = vmul.f32 %v1254, %v1258
    %v1263 = vsub.f32 %v1160, 10.6
    %v1264 = vsub.f32 %v1161, 10.6
    %v1265 = vsub.f32 %v1162, 10.6
    %v1266 = vsub.f32 %v1163, 10.6
    %v1267 = vmul.f32 %v1263, 0.3
    %v1268 = vmul.f32 %v1264, 0.3
    %v1269 = vmul.f32 %v1265, 0.3
    %v1270 = vmul.f32 %v1266, 0.3
    %v1271 = vsub.f32 %v1215, %v1243
    %v1272 = vsub.f32 %v1216, %v1244
    %v1273 = vsub.f32 %v1217, %v1245
    %v1274 = vsub.f32 %v1218, %v1246
    %v1275 = vsub.f32 %v1271, %v1259
    %v1276 = vsub.f32 %v1272, %v1260
    %v1277 = vsub.f32 %v1273, %v1261
    %v1278 = vsub.f32 %v1274, %v1262
    %v1279 = vsub.f32 %v1275, %v1267
    %v1280 = vsub.f32 %v1276, %v1268
    %v1281 = vsub.f32 %v1277, %v1269
    %v1282 = vsub.f32 %v1278, %v1270
    %v1283 = vmul.f32 %v1279, 0.1
    %v1284 = vmul.f32 %v1280, 0.1
    %v1285 = vmul.f32 %v1281, 0.1
    %v1286 = vmul.f32 %v1282, 0.1
    %v1287 = vadd.f32 %v1160, %v1283
    %v1288 = vadd.f32 %v1161, %v1284
    %v1289 = vadd.f32 %v1162, %v1285
    %v1290 = vadd.f32 %v1163, %v1286
    %v1291 = vmul.f32 %v1168, %v857
    %v1292 = vmul.f32 %v1169, %v858
    %v1293 = vmul.f32 %v1170, %v859
    %v1294 = vmul.f32 %v1171, %v860
    %v1295 = vadd.f32 %v1291, %v861
    %v1296 = vadd.f32 %v1292, %v862
    %v1297 = vadd.f32 %v1293, %v863
    %v1298 = vadd.f32 %v1294, %v864
    %v1299 = vmul.f32 %v1176, %v865
    %v1300 = vmul.f32 %v1177, %v866
    %v1301 = vmul.f32 %v1178, %v867
    %v1302 = vmul.f32 %v1179, %v868
    %v1303 = vadd.f32 %v1299, %v869
    %v1304 = vadd.f32 %v1300, %v870
    %v1305 = vadd.f32 %v1301, %v871
    %v1306 = vadd.f32 %v1302, %v872
    %v1307 = vmul.f32 %v1184, %v873
    %v1308 = vmul.f32 %v1185, %v874
    %v1309 = vmul.f32 %v1186, %v875
    %v1310 = vmul.f32 %v1187, %v876
    %v1311 = vadd.f32 %v1307, %v877
    %v1312 = vadd.f32 %v1308, %v878
    %v1313 = vadd.f32 %v1309, %v879
    %v1314 = vadd.f32 %v1310, %v880
    %v1315 = vsub.f32 %v1287, 2.3
    %v1316 = vsub.f32 %v1288, 2.3
    %v1317 = vsub.f32 %v1289, 2.3
    %v1318 = vsub.f32 %v1290, 2.3
    %vm1319 = vcmp.gt.f32.partialorder %v1315, 0.0
    %vm1320 = vcmp.gt.f32.partialorder %v1316, 0.0
    %vm1321 = vcmp.gt.f32.partialorder %v1317, 0.0
    %vm1322 = vcmp.gt.f32.partialorder %v1318, 0.0
    %v1323 = vsel %vm1319, 1, 0
    %v1324 = vsel %vm1320, 1, 0
    %v1325 = vsel %vm1321, 1, 0
    %v1326 = vsel %vm1322, 1, 0
    %v1327 = vcvt.s32.f32 %v1323
    %v1328 = vcvt.s32.f32 %v1324
    %v1329 = vcvt.s32.f32 %v1325
    %v1330 = vcvt.s32.f32 %v1326
    %v1331 = vpack.c.bf16 %v1328, %v1327
    %v1332 = vpack.c.bf16 %v1330, %v1329
    %s1333 = scalar_lea.vmem [#allocation8], 48
    %1334 = vst [vmem:[%s1333] sm:$0xff] %v1331
    %s1335 = scalar_lea.vmem [#allocation8], 56
    %1336 = vst [vmem:[%s1335] sm:$0xff] %v1332
    %s1337 = scalar_lea.vmem [#allocation2], 128
    %v1338 = vld [vmem:[%s1337] sm:$0xff]
    %v1339 = vld [vmem:[%s1337 + $0x8] sm:$0xff]
    %v1340 = vld [vmem:[%s1337 + $0x10] sm:$0xff]
    %v1341 = vld [vmem:[%s1337 + $0x18] sm:$0xff]
    %v1342 = vadd.f32 %v1338, %v885
    %v1343 = vadd.f32 %v1339, %v885
    %v1344 = vadd.f32 %v1340, %v885
    %v1345 = vadd.f32 %v1341, %v885
    %v1346 = vmul.f32 %v1303, %v1303
    %v1347 = vmul.f32 %v1304, %v1304
    %v1348 = vmul.f32 %v1305, %v1305
    %v1349 = vmul.f32 %v1306, %v1306
    %v1350 = vmul.f32 %v1346, %v1303
    %v1351 = vmul.f32 %v1347, %v1304
    %v1352 = vmul.f32 %v1348, %v1305
    %v1353 = vmul.f32 %v1349, %v1306
    %v1354 = vmul.f32 %v1295, %v1295
    %v1355 = vmul.f32 %v1296, %v1296
    %v1356 = vmul.f32 %v1297, %v1297
    %v1357 = vmul.f32 %v1298, %v1298
    %v1358 = vmul.f32 %v1311, %v1350
    %v1359 = vmul.f32 %v1312, %v1351
    %v1360 = vmul.f32 %v1313, %v1352
    %v1361 = vmul.f32 %v1314, %v1353
    %v1362 = vmul.f32 %v1358, 120.0
    %v1363 = vmul.f32 %v1359, 120.0
    %v1364 = vmul.f32 %v1360, 120.0
    %v1365 = vmul.f32 %v1361, 120.0
    %v1366 = vsub.f32 %v1287, 115.0
    %v1367 = vsub.f32 %v1288, 115.0
    %v1368 = vsub.f32 %v1289, 115.0
    %v1369 = vsub.f32 %v1290, 115.0
    %v1370 = vmul.f32 %v1362, %v1366
    %v1371 = vmul.f32 %v1363, %v1367
    %v1372 = vmul.f32 %v1364, %v1368
    %v1373 = vmul.f32 %v1365, %v1369
    %v1374 = vmul.f32 %v1354, %v1354
    %v1375 = vmul.f32 %v1355, %v1355
    %v1376 = vmul.f32 %v1356, %v1356
    %v1377 = vmul.f32 %v1357, %v1357
    %v1378 = vmul.f32 %v1374, 36.0
    %v1379 = vmul.f32 %v1375, 36.0
    %v1380 = vmul.f32 %v1376, 36.0
    %v1381 = vmul.f32 %v1377, 36.0
    %v1382 = vsub.f32 %v1287, -12.0
    %v1383 = vsub.f32 %v1288, -12.0
    %v1384 = vsub.f32 %v1289, -12.0
    %v1385 = vsub.f32 %v1290, -12.0
    %v1386 = vmul.f32 %v1378, %v1382
    %v1387 = vmul.f32 %v1379, %v1383
    %v1388 = vmul.f32 %v1380, %v1384
    %v1389 = vmul.f32 %v1381, %v1385
    %v1390 = vsub.f32 %v1287, 10.6
    %v1391 = vsub.f32 %v1288, 10.6
    %v1392 = vsub.f32 %v1289, 10.6
    %v1393 = vsub.f32 %v1290, 10.6
    %v1394 = vmul.f32 %v1390, 0.3
    %v1395 = vmul.f32 %v1391, 0.3
    %v1396 = vmul.f32 %v1392, 0.3
    %v1397 = vmul.f32 %v1393, 0.3
    %v1398 = vsub.f32 %v1342, %v1370
    %v1399 = vsub.f32 %v1343, %v1371
    %v1400 = vsub.f32 %v1344, %v1372
    %v1401 = vsub.f32 %v1345, %v1373
    %v1402 = vsub.f32 %v1398, %v1386
    %v1403 = vsub.f32 %v1399, %v1387
    %v1404 = vsub.f32 %v1400, %v1388
    %v1405 = vsub.f32 %v1401, %v1389
    %v1406 = vsub.f32 %v1402, %v1394
    %v1407 = vsub.f32 %v1403, %v1395
    %v1408 = vsub.f32 %v1404, %v1396
    %v1409 = vsub.f32 %v1405, %v1397
    %v1410 = vmul.f32 %v1406, 0.1
    %v1411 = vmul.f32 %v1407, 0.1
    %v1412 = vmul.f32 %v1408, 0.1
    %v1413 = vmul.f32 %v1409, 0.1
    %v1414 = vadd.f32 %v1287, %v1410
    %v1415 = vadd.f32 %v1288, %v1411
    %v1416 = vadd.f32 %v1289, %v1412
    %v1417 = vadd.f32 %v1290, %v1413
    %v1418 = vmul.f32 %v1295, %v857
    %v1419 = vmul.f32 %v1296, %v858
    %v1420 = vmul.f32 %v1297, %v859
    %v1421 = vmul.f32 %v1298, %v860
    %v1422 = vadd.f32 %v1418, %v861
    %v1423 = vadd.f32 %v1419, %v862
    %v1424 = vadd.f32 %v1420, %v863
    %v1425 = vadd.f32 %v1421, %v864
    %v1426 = vmul.f32 %v1303, %v865
    %v1427 = vmul.f32 %v1304, %v866
    %v1428 = vmul.f32 %v1305, %v867
    %v1429 = vmul.f32 %v1306, %v868
    %v1430 = vadd.f32 %v1426, %v869
    %v1431 = vadd.f32 %v1427, %v870
    %v1432 = vadd.f32 %v1428, %v871
    %v1433 = vadd.f32 %v1429, %v872
    %v1434 = vmul.f32 %v1311, %v873
    %v1435 = vmul.f32 %v1312, %v874
    %v1436 = vmul.f32 %v1313, %v875
    %v1437 = vmul.f32 %v1314, %v876
    %v1438 = vadd.f32 %v1434, %v877
    %v1439 = vadd.f32 %v1435, %v878
    %v1440 = vadd.f32 %v1436, %v879
    %v1441 = vadd.f32 %v1437, %v880
    %v1442 = vsub.f32 %v1414, 2.3
    %v1443 = vsub.f32 %v1415, 2.3
    %v1444 = vsub.f32 %v1416, 2.3
    %v1445 = vsub.f32 %v1417, 2.3
    %vm1446 = vcmp.gt.f32.partialorder %v1442, 0.0
    %vm1447 = vcmp.gt.f32.partialorder %v1443, 0.0
    %vm1448 = vcmp.gt.f32.partialorder %v1444, 0.0
    %vm1449 = vcmp.gt.f32.partialorder %v1445, 0.0
    %v1450 = vsel %vm1446, 1, 0
    %v1451 = vsel %vm1447, 1, 0
    %v1452 = vsel %vm1448, 1, 0
    %v1453 = vsel %vm1449, 1, 0
    %v1454 = vcvt.s32.f32 %v1450
    %v1455 = vcvt.s32.f32 %v1451
    %v1456 = vcvt.s32.f32 %v1452
    %v1457 = vcvt.s32.f32 %v1453
    %v1458 = vpack.c.bf16 %v1455, %v1454
    %v1459 = vpack.c.bf16 %v1457, %v1456
    %s1460 = scalar_lea.vmem [#allocation8], 64
    %1461 = vst [vmem:[%s1460] sm:$0xff] %v1458
    %s1462 = scalar_lea.vmem [#allocation8], 72
    %1463 = vst [vmem:[%s1462] sm:$0xff] %v1459
    %s1464 = scalar_lea.vmem [#allocation2], 160
    %v1465 = vld [vmem:[%s1464] sm:$0xff]
    %v1466 = vld [vmem:[%s1464 + $0x8] sm:$0xff]
    %v1467 = vld [vmem:[%s1464 + $0x10] sm:$0xff]
    %v1468 = vld [vmem:[%s1464 + $0x18] sm:$0xff]
    %v1469 = vadd.f32 %v1465, %v885
    %v1470 = vadd.f32 %v1466, %v885
    %v1471 = vadd.f32 %v1467, %v885
    %v1472 = vadd.f32 %v1468, %v885
    %v1473 = vmul.f32 %v1430, %v1430
    %v1474 = vmul.f32 %v1431, %v1431
    %v1475 = vmul.f32 %v1432, %v1432
    %v1476 = vmul.f32 %v1433, %v1433
    %v1477 = vmul.f32 %v1473, %v1430
    %v1478 = vmul.f32 %v1474, %v1431
    %v1479 = vmul.f32 %v1475, %v1432
    %v1480 = vmul.f32 %v1476, %v1433
    %v1481 = vmul.f32 %v1422, %v1422
    %v1482 = vmul.f32 %v1423, %v1423
    %v1483 = vmul.f32 %v1424, %v1424
    %v1484 = vmul.f32 %v1425, %v1425
    %v1485 = vmul.f32 %v1438, %v1477
    %v1486 = vmul.f32 %v1439, %v1478
    %v1487 = vmul.f32 %v1440, %v1479
    %v1488 = vmul.f32 %v1441, %v1480
    %v1489 = vmul.f32 %v1485, 120.0
    %v1490 = vmul.f32 %v1486, 120.0
    %v1491 = vmul.f32 %v1487, 120.0
    %v1492 = vmul.f32 %v1488, 120.0
    %v1493 = vsub.f32 %v1414, 115.0
    %v1494 = vsub.f32 %v1415, 115.0
    %v1495 = vsub.f32 %v1416, 115.0
    %v1496 = vsub.f32 %v1417, 115.0
    %v1497 = vmul.f32 %v1489, %v1493
    %v1498 = vmul.f32 %v1490, %v1494
    %v1499 = vmul.f32 %v1491, %v1495
    %v1500 = vmul.f32 %v1492, %v1496
    %v1501 = vmul.f32 %v1481, %v1481
    %v1502 = vmul.f32 %v1482, %v1482
    %v1503 = vmul.f32 %v1483, %v1483
    %v1504 = vmul.f32 %v1484, %v1484
    %v1505 = vmul.f32 %v1501, 36.0
    %v1506 = vmul.f32 %v1502, 36.0
    %v1507 = vmul.f32 %v1503, 36.0
    %v1508 = vmul.f32 %v1504, 36.0
    %v1509 = vsub.f32 %v1414, -12.0
    %v1510 = vsub.f32 %v1415, -12.0
    %v1511 = vsub.f32 %v1416, -12.0
    %v1512 = vsub.f32 %v1417, -12.0
    %v1513 = vmul.f32 %v1505, %v1509
    %v1514 = vmul.f32 %v1506, %v1510
    %v1515 = vmul.f32 %v1507, %v1511
    %v1516 = vmul.f32 %v1508, %v1512
    %v1517 = vsub.f32 %v1414, 10.6
    %v1518 = vsub.f32 %v1415, 10.6
    %v1519 = vsub.f32 %v1416, 10.6
    %v1520 = vsub.f32 %v1417, 10.6
    %v1521 = vmul.f32 %v1517, 0.3
    %v1522 = vmul.f32 %v1518, 0.3
    %v1523 = vmul.f32 %v1519, 0.3
    %v1524 = vmul.f32 %v1520, 0.3
    %v1525 = vsub.f32 %v1469, %v1497
    %v1526 = vsub.f32 %v1470, %v1498
    %v1527 = vsub.f32 %v1471, %v1499
    %v1528 = vsub.f32 %v1472, %v1500
    %v1529 = vsub.f32 %v1525, %v1513
    %v1530 = vsub.f32 %v1526, %v1514
    %v1531 = vsub.f32 %v1527, %v1515
    %v1532 = vsub.f32 %v1528, %v1516
    %v1533 = vsub.f32 %v1529, %v1521
    %v1534 = vsub.f32 %v1530, %v1522
    %v1535 = vsub.f32 %v1531, %v1523
    %v1536 = vsub.f32 %v1532, %v1524
    %v1537 = vmul.f32 %v1533, 0.1
    %v1538 = vmul.f32 %v1534, 0.1
    %v1539 = vmul.f32 %v1535, 0.1
    %v1540 = vmul.f32 %v1536, 0.1
    %v1541 = vadd.f32 %v1414, %v1537
    %v1542 = vadd.f32 %v1415, %v1538
    %v1543 = vadd.f32 %v1416, %v1539
    %v1544 = vadd.f32 %v1417, %v1540
    %v1545 = vmul.f32 %v1422, %v857
    %v1546 = vmul.f32 %v1423, %v858
    %v1547 = vmul.f32 %v1424, %v859
    %v1548 = vmul.f32 %v1425, %v860
    %v1549 = vadd.f32 %v1545, %v861
    %v1550 = vadd.f32 %v1546, %v862
    %v1551 = vadd.f32 %v1547, %v863
    %v1552 = vadd.f32 %v1548, %v864
    %v1553 = vmul.f32 %v1430, %v865
    %v1554 = vmul.f32 %v1431, %v866
    %v1555 = vmul.f32 %v1432, %v867
    %v1556 = vmul.f32 %v1433, %v868
    %v1557 = vadd.f32 %v1553, %v869
    %v1558 = vadd.f32 %v1554, %v870
    %v1559 = vadd.f32 %v1555, %v871
    %v1560 = vadd.f32 %v1556, %v872
    %v1561 = vmul.f32 %v1438, %v873
    %v1562 = vmul.f32 %v1439, %v874
    %v1563 = vmul.f32 %v1440, %v875
    %v1564 = vmul.f32 %v1441, %v876
    %v1565 = vadd.f32 %v1561, %v877
    %v1566 = vadd.f32 %v1562, %v878
    %v1567 = vadd.f32 %v1563, %v879
    %v1568 = vadd.f32 %v1564, %v880
    %v1569 = vsub.f32 %v1541, 2.3
    %v1570 = vsub.f32 %v1542, 2.3
    %v1571 = vsub.f32 %v1543, 2.3
    %v1572 = vsub.f32 %v1544, 2.3
    %vm1573 = vcmp.gt.f32.partialorder %v1569, 0.0
    %vm1574 = vcmp.gt.f32.partialorder %v1570, 0.0
    %vm1575 = vcmp.gt.f32.partialorder %v1571, 0.0
    %vm1576 = vcmp.gt.f32.partialorder %v1572, 0.0
    %v1577 = vsel %vm1573, 1, 0
    %v1578 = vsel %vm1574, 1, 0
    %v1579 = vsel %vm1575, 1, 0
    %v1580 = vsel %vm1576, 1, 0
    %v1581 = vcvt.s32.f32 %v1577
    %v1582 = vcvt.s32.f32 %v1578
    %v1583 = vcvt.s32.f32 %v1579
    %v1584 = vcvt.s32.f32 %v1580
    %v1585 = vpack.c.bf16 %v1582, %v1581
    %v1586 = vpack.c.bf16 %v1584, %v1583
    %s1587 = scalar_lea.vmem [#allocation8], 80
    %1588 = vst [vmem:[%s1587] sm:$0xff] %v1585
    %s1589 = scalar_lea.vmem [#allocation8], 88
    %1590 = vst [vmem:[%s1589] sm:$0xff] %v1586
    %s1591 = scalar_lea.vmem [#allocation2], 192
    %v1592 = vld [vmem:[%s1591] sm:$0xff]
    %v1593 = vld [vmem:[%s1591 + $0x8] sm:$0xff]
    %v1594 = vld [vmem:[%s1591 + $0x10] sm:$0xff]
    %v1595 = vld [vmem:[%s1591 + $0x18] sm:$0xff]
    %v1596 = vadd.f32 %v1592, %v885
    %v1597 = vadd.f32 %v1593, %v885
    %v1598 = vadd.f32 %v1594, %v885
    %v1599 = vadd.f32 %v1595, %v885
    %v1600 = vmul.f32 %v1557, %v1557
    %v1601 = vmul.f32 %v1558, %v1558
    %v1602 = vmul.f32 %v1559, %v1559
    %v1603 = vmul.f32 %v1560, %v1560
    %v1604 = vmul.f32 %v1600, %v1557
    %v1605 = vmul.f32 %v1601, %v1558
    %v1606 = vmul.f32 %v1602, %v1559
    %v1607 = vmul.f32 %v1603, %v1560
    %v1608 = vmul.f32 %v1549, %v1549
    %v1609 = vmul.f32 %v1550, %v1550
    %v1610 = vmul.f32 %v1551, %v1551
    %v1611 = vmul.f32 %v1552, %v1552
    %v1612 = vmul.f32 %v1565, %v1604
    %v1613 = vmul.f32 %v1566, %v1605
    %v1614 = vmul.f32 %v1567, %v1606
    %v1615 = vmul.f32 %v1568, %v1607
    %v1616 = vmul.f32 %v1612, 120.0
    %v1617 = vmul.f32 %v1613, 120.0
    %v1618 = vmul.f32 %v1614, 120.0
    %v1619 = vmul.f32 %v1615, 120.0
    %v1620 = vsub.f32 %v1541, 115.0
    %v1621 = vsub.f32 %v1542, 115.0
    %v1622 = vsub.f32 %v1543, 115.0
    %v1623 = vsub.f32 %v1544, 115.0
    %v1624 = vmul.f32 %v1616, %v1620
    %v1625 = vmul.f32 %v1617, %v1621
    %v1626 = vmul.f32 %v1618, %v1622
    %v1627 = vmul.f32 %v1619, %v1623
    %v1628 = vmul.f32 %v1608, %v1608
    %v1629 = vmul.f32 %v1609, %v1609
    %v1630 = vmul.f32 %v1610, %v1610
    %v1631 = vmul.f32 %v1611, %v1611
    %v1632 = vmul.f32 %v1628, 36.0
    %v1633 = vmul.f32 %v1629, 36.0
    %v1634 = vmul.f32 %v1630, 36.0
    %v1635 = vmul.f32 %v1631, 36.0
    %v1636 = vsub.f32 %v1541, -12.0
    %v1637 = vsub.f32 %v1542, -12.0
    %v1638 = vsub.f32 %v1543, -12.0
    %v1639 = vsub.f32 %v1544, -12.0
    %v1640 = vmul.f32 %v1632, %v1636
    %v1641 = vmul.f32 %v1633, %v1637
    %v1642 = vmul.f32 %v1634, %v1638
    %v1643 = vmul.f32 %v1635, %v1639
    %v1644 = vsub.f32 %v1541, 10.6
    %v1645 = vsub.f32 %v1542, 10.6
    %v1646 = vsub.f32 %v1543, 10.6
    %v1647 = vsub.f32 %v1544, 10.6
    %v1648 = vmul.f32 %v1644, 0.3
    %v1649 = vmul.f32 %v1645, 0.3
    %v1650 = vmul.f32 %v1646, 0.3
    %v1651 = vmul.f32 %v1647, 0.3
    %v1652 = vsub.f32 %v1596, %v1624
    %v1653 = vsub.f32 %v1597, %v1625
    %v1654 = vsub.f32 %v1598, %v1626
    %v1655 = vsub.f32 %v1599, %v1627
    %v1656 = vsub.f32 %v1652, %v1640
    %v1657 = vsub.f32 %v1653, %v1641
    %v1658 = vsub.f32 %v1654, %v1642
    %v1659 = vsub.f32 %v1655, %v1643
    %v1660 = vsub.f32 %v1656, %v1648
    %v1661 = vsub.f32 %v1657, %v1649
    %v1662 = vsub.f32 %v1658, %v1650
    %v1663 = vsub.f32 %v1659, %v1651
    %v1664 = vmul.f32 %v1660, 0.1
    %v1665 = vmul.f32 %v1661, 0.1
    %v1666 = vmul.f32 %v1662, 0.1
    %v1667 = vmul.f32 %v1663, 0.1
    %v1668 = vadd.f32 %v1541, %v1664
    %v1669 = vadd.f32 %v1542, %v1665
    %v1670 = vadd.f32 %v1543, %v1666
    %v1671 = vadd.f32 %v1544, %v1667
    %v1672 = vmul.f32 %v1549, %v857
    %v1673 = vmul.f32 %v1550, %v858
    %v1674 = vmul.f32 %v1551, %v859
    %v1675 = vmul.f32 %v1552, %v860
    %v1676 = vadd.f32 %v1672, %v861
    %v1677 = vadd.f32 %v1673, %v862
    %v1678 = vadd.f32 %v1674, %v863
    %v1679 = vadd.f32 %v1675, %v864
    %v1680 = vmul.f32 %v1557, %v865
    %v1681 = vmul.f32 %v1558, %v866
    %v1682 = vmul.f32 %v1559, %v867
    %v1683 = vmul.f32 %v1560, %v868
    %v1684 = vadd.f32 %v1680, %v869
    %v1685 = vadd.f32 %v1681, %v870
    %v1686 = vadd.f32 %v1682, %v871
    %v1687 = vadd.f32 %v1683, %v872
    %v1688 = vmul.f32 %v1565, %v873
    %v1689 = vmul.f32 %v1566, %v874
    %v1690 = vmul.f32 %v1567, %v875
    %v1691 = vmul.f32 %v1568, %v876
    %v1692 = vadd.f32 %v1688, %v877
    %v1693 = vadd.f32 %v1689, %v878
    %v1694 = vadd.f32 %v1690, %v879
    %v1695 = vadd.f32 %v1691, %v880
    %v1696 = vsub.f32 %v1668, 2.3
    %v1697 = vsub.f32 %v1669, 2.3
    %v1698 = vsub.f32 %v1670, 2.3
    %v1699 = vsub.f32 %v1671, 2.3
    %vm1700 = vcmp.gt.f32.partialorder %v1696, 0.0
    %vm1701 = vcmp.gt.f32.partialorder %v1697, 0.0
    %vm1702 = vcmp.gt.f32.partialorder %v1698, 0.0
    %vm1703 = vcmp.gt.f32.partialorder %v1699, 0.0
    %v1704 = vsel %vm1700, 1, 0
    %v1705 = vsel %vm1701, 1, 0
    %v1706 = vsel %vm1702, 1, 0
    %v1707 = vsel %vm1703, 1, 0
    %v1708 = vcvt.s32.f32 %v1704
    %v1709 = vcvt.s32.f32 %v1705
    %v1710 = vcvt.s32.f32 %v1706
    %v1711 = vcvt.s32.f32 %v1707
    %v1712 = vpack.c.bf16 %v1709, %v1708
    %v1713 = vpack.c.bf16 %v1711, %v1710
    %s1714 = scalar_lea.vmem [#allocation8], 96
    %1715 = vst [vmem:[%s1714] sm:$0xff] %v1712
    %s1716 = scalar_lea.vmem [#allocation8], 104
    %1717 = vst [vmem:[%s1716] sm:$0xff] %v1713
    %s1718 = scalar_lea.vmem [#allocation2], 224
    %v1719 = vld [vmem:[%s1718] sm:$0xff]
    %v1720 = vld [vmem:[%s1718 + $0x8] sm:$0xff]
    %v1721 = vld [vmem:[%s1718 + $0x10] sm:$0xff]
    %v1722 = vld [vmem:[%s1718 + $0x18] sm:$0xff]
    %v1723 = vadd.f32 %v1719, %v885
    %v1724 = vadd.f32 %v1720, %v885
    %v1725 = vadd.f32 %v1721, %v885
    %v1726 = vadd.f32 %v1722, %v885
    %v1727 = vmul.f32 %v1684, %v1684
    %v1728 = vmul.f32 %v1685, %v1685
    %v1729 = vmul.f32 %v1686, %v1686
    %v1730 = vmul.f32 %v1687, %v1687
    %v1731 = vmul.f32 %v1727, %v1684
    %v1732 = vmul.f32 %v1728, %v1685
    %v1733 = vmul.f32 %v1729, %v1686
    %v1734 = vmul.f32 %v1730, %v1687
    %v1735 = vmul.f32 %v1676, %v1676
    %v1736 = vmul.f32 %v1677, %v1677
    %v1737 = vmul.f32 %v1678, %v1678
    %v1738 = vmul.f32 %v1679, %v1679
    %v1739 = vmul.f32 %v1692, %v1731
    %v1740 = vmul.f32 %v1693, %v1732
    %v1741 = vmul.f32 %v1694, %v1733
    %v1742 = vmul.f32 %v1695, %v1734
    %v1743 = vmul.f32 %v1739, 120.0
    %v1744 = vmul.f32 %v1740, 120.0
    %v1745 = vmul.f32 %v1741, 120.0
    %v1746 = vmul.f32 %v1742, 120.0
    %v1747 = vsub.f32 %v1668, 115.0
    %v1748 = vsub.f32 %v1669, 115.0
    %v1749 = vsub.f32 %v1670, 115.0
    %v1750 = vsub.f32 %v1671, 115.0
    %v1751 = vmul.f32 %v1743, %v1747
    %v1752 = vmul.f32 %v1744, %v1748
    %v1753 = vmul.f32 %v1745, %v1749
    %v1754 = vmul.f32 %v1746, %v1750
    %v1755 = vmul.f32 %v1735, %v1735
    %v1756 = vmul.f32 %v1736, %v1736
    %v1757 = vmul.f32 %v1737, %v1737
    %v1758 = vmul.f32 %v1738, %v1738
    %v1759 = vmul.f32 %v1755, 36.0
    %v1760 = vmul.f32 %v1756, 36.0
    %v1761 = vmul.f32 %v1757, 36.0
    %v1762 = vmul.f32 %v1758, 36.0
    %v1763 = vsub.f32 %v1668, -12.0
    %v1764 = vsub.f32 %v1669, -12.0
    %v1765 = vsub.f32 %v1670, -12.0
    %v1766 = vsub.f32 %v1671, -12.0
    %v1767 = vmul.f32 %v1759, %v1763
    %v1768 = vmul.f32 %v1760, %v1764
    %v1769 = vmul.f32 %v1761, %v1765
    %v1770 = vmul.f32 %v1762, %v1766
    %v1771 = vsub.f32 %v1668, 10.6
    %v1772 = vsub.f32 %v1669, 10.6
    %v1773 = vsub.f32 %v1670, 10.6
    %v1774 = vsub.f32 %v1671, 10.6
    %v1775 = vmul.f32 %v1771, 0.3
    %v1776 = vmul.f32 %v1772, 0.3
    %v1777 = vmul.f32 %v1773, 0.3
    %v1778 = vmul.f32 %v1774, 0.3
    %v1779 = vsub.f32 %v1723, %v1751
    %v1780 = vsub.f32 %v1724, %v1752
    %v1781 = vsub.f32 %v1725, %v1753
    %v1782 = vsub.f32 %v1726, %v1754
    %v1783 = vsub.f32 %v1779, %v1767
    %v1784 = vsub.f32 %v1780, %v1768
    %v1785 = vsub.f32 %v1781, %v1769
    %v1786 = vsub.f32 %v1782, %v1770
    %v1787 = vsub.f32 %v1783, %v1775
    %v1788 = vsub.f32 %v1784, %v1776
    %v1789 = vsub.f32 %v1785, %v1777
    %v1790 = vsub.f32 %v1786, %v1778
    %v1791 = vmul.f32 %v1787, 0.1
    %v1792 = vmul.f32 %v1788, 0.1
    %v1793 = vmul.f32 %v1789, 0.1
    %v1794 = vmul.f32 %v1790, 0.1
    %v1795 = vadd.f32 %v1668, %v1791
    %v1796 = vadd.f32 %v1669, %v1792
    %v1797 = vadd.f32 %v1670, %v1793
    %v1798 = vadd.f32 %v1671, %v1794
    %v1799 = vsub.f32 %v1795, 2.3
    %v1800 = vsub.f32 %v1796, 2.3
    %v1801 = vsub.f32 %v1797, 2.3
    %v1802 = vsub.f32 %v1798, 2.3
    %vm1803 = vcmp.gt.f32.partialorder %v1799, 0.0
    %vm1804 = vcmp.gt.f32.partialorder %v1800, 0.0
    %vm1805 = vcmp.gt.f32.partialorder %v1801, 0.0
    %vm1806 = vcmp.gt.f32.partialorder %v1802, 0.0
    %v1807 = vsel %vm1803, 1, 0
    %v1808 = vsel %vm1804, 1, 0
    %v1809 = vsel %vm1805, 1, 0
    %v1810 = vsel %vm1806, 1, 0
    %v1811 = vcvt.s32.f32 %v1807
    %v1812 = vcvt.s32.f32 %v1808
    %v1813 = vcvt.s32.f32 %v1809
    %v1814 = vcvt.s32.f32 %v1810
    %v1815 = vpack.c.bf16 %v1812, %v1811
    %v1816 = vpack.c.bf16 %v1814, %v1813
    %s1817 = scalar_lea.vmem [#allocation8], 112
    %1818 = vst [vmem:[%s1817] sm:$0xff] %v1815
    %s1819 = scalar_lea.vmem [#allocation8], 120
    %1820 = vst [vmem:[%s1819] sm:$0xff] %v1816
    // Predicated region
    $region26: #{tpu_custom_call.1} parent=1 // pred_check
      _
    $region27: #{tpu_custom_call.1} parent=1 // pred_check_branch
      %1822 = sbr.rel (0) target = $region29
    $region28: #{tpu_custom_call.1} parent=1 // pred_region
      %1824 = vsyncadd [#allocation5], 0
      %s1825 = sshll.u32 [#allocation8], 4
      %s1826 = int_to_ptr.vmem [resolvable:$true] %s1825
      %s1827 = sshll.u32 %s4, 4
      %s1828 = int_to_ptr.hbm [resolvable:$true] %s1827
      %1833 = dma.vmem_to_hbm [thread:$0]  %s1826, 2048, %s1828, [#allocation5], 128, 128, 8
    $region29: #{tpu_custom_call.1} parent=1 // pred_fallthru
      _
    // Predicated region
    $region30: #{tpu_custom_call.1} parent=1 // pred_check
      _
    $region31: #{tpu_custom_call.1} parent=1 // pred_check_branch
      %1835 = sbr.rel (0) target = $region33
    $region32: #{tpu_custom_call.1} parent=1 // pred_region
      %1837 = dma.done [#allocation5], 2048
    $region33: #{tpu_custom_call.1} parent=1 // pred_fallthru
      _
    %1838 = vsyncpa [#allocation4], 1
    %1839 = vsyncpa [#allocation7], 1
    %1840 = vsyncpa [#allocation5], 1

</llo_original>
